<compile_context>
chip_gen: v5e
topology: v5e:2x2
jax: 0.10.0
libtpu: 0.0.40
codegen_flags: <defaults>
</compile_context>

<pallas_src>
import jax
import jax.numpy as jnp
from jax.experimental import pallas as pl
from jax.experimental.pallas import tpu as pltpu

HIDDEN = 768   # in_features of clip_head
OUT = 640      # out_features of clip_head


def mclip_head_kernel(embs_ref, attn_ref, w_ref, b_ref, out_ref):
    # embs_ref: [tb, S, H] (bf16 or f32), attn_ref: [tb, S] f32 (pre-normalized),
    # w_ref: [H, N], b_ref: [1, N] f32, out_ref: [tb, N] f32
    embs = embs_ref[...].astype(jnp.float32)                 # [tb, S, H] f32
    attn = attn_ref[...]                                     # [tb, S]    f32
    pooled = jnp.sum(embs * attn[:, :, None], axis=1)        # [tb, H]    f32 (masked mean)
    out_ref[...] = (
        jnp.dot(pooled.astype(w_ref.dtype), w_ref[...],
                preferred_element_type=jnp.float32)
        + b_ref[...]
    ).astype(out_ref.dtype)


def _pick_tb(B):
    # Largest multiple-of-8 batch tile that divides B; fall back to full B.
    for tb in (256, 128, 64, 32, 16, 8):
        if B % tb == 0:
            return tb
    return B


def multilingual_clip_head(embs, att, w_t, b, *, tb=None):
    """embs: [B,S,H] (bf16/f32), att: [B,S] mask, w_t: [H,N] (= torch weight.T), b: [N]."""
    B, S, H = embs.shape
    H2, N = w_t.shape
    assert H == H2 == HIDDEN and N == OUT

    if tb is None:
        tb = _pick_tb(B)
    assert B % tb == 0, f"batch {B} must be divisible by batch tile {tb}"
    assert tb % 8 == 0 or tb == B, "batch tile must be a multiple of 8 or the full batch"

    # Pre-normalize pooling weights (cheap XLA op); kernel only does a weighted sum.
    att_f32 = att.astype(jnp.float32)
    att_norm = att_f32 / att_f32.sum(axis=1, keepdims=True)   # NaN for all-zero rows (== torch)

    e_bytes = jnp.dtype(embs.dtype).itemsize
    w_bytes = jnp.dtype(w_t.dtype).itemsize
    cost = pl.CostEstimate(
        flops=2 * B * S * H + 2 * B * H * N,
        transcendentals=0,
        bytes_accessed=B * S * H * e_bytes + B * S * 4 + H * N * w_bytes + N * 4 + B * N * 4,
    )

    return pl.pallas_call(
        mclip_head_kernel,
        out_shape=jax.ShapeDtypeStruct((B, N), jnp.float32),
        grid_spec=pltpu.PrefetchScalarGridSpec(
            num_scalar_prefetch=0,
            grid=(B // tb,),
            in_specs=[
                pl.BlockSpec((tb, S, H), lambda i: (i, 0, 0)),   # embeddings: tiled over batch
                pl.BlockSpec((tb, S), lambda i: (i, 0)),          # normalized attention weights
                pl.BlockSpec((H, N), lambda i: (0, 0)),           # head weight: full, resident
                pl.BlockSpec((1, N), lambda i: (0, 0)),           # bias: full, resident
            ],
            out_specs=pl.BlockSpec((tb, N), lambda i: (i, 0)),    # lane-dense (tb x 640) store
        ),
        compiler_params=pltpu.CompilerParams(
            dimension_semantics=("parallel",),        # shard batch tiles across TCs (v7x megacore)
            vmem_limit_bytes=48 * 1024 * 1024,        # headroom under v7x's 64 MiB VMEM
        ),
        cost_estimate=cost,
    )(embs, att_norm, w_t, b.reshape(1, N).astype(jnp.float32))


def reference(embs, att, w_t, b):
    # Pure-JAX reference in f32 (same math as the PyTorch forward).
    embs = embs.astype(jnp.float32)
    att = att.astype(jnp.float32)
    w = w_t.astype(jnp.float32)
    pooled = (embs * att[:, :, None]).sum(axis=1) / att.sum(axis=1)[:, None]
    return pooled @ w + b.astype(jnp.float32)[None, :]


if __name__ == "__main__":
    B, S = 16, 8
    key = jax.random.PRNGKey(0)
    k_embs, k_w, k_b = jax.random.split(key, 3)

    # Deterministic synthetic "transformer output" embeddings, fed as bf16.
    embs = jax.random.normal(k_embs, (B, S, HIDDEN), dtype=jnp.float32).astype(jnp.bfloat16)

    # Attention mask with padding: first half of the batch fully valid, second half
    # padded after 5 tokens.
    lengths = jnp.array([S] * (B // 2) + [5] * (B // 2), dtype=jnp.int32)
    att = (jnp.arange(S)[None, :] < lengths[:, None]).astype(jnp.int32)

    # clip_head params (torch stores weight as [640, 768]; we keep W.T = [768, 640]).
    w_t = (jax.random.normal(k_w, (HIDDEN, OUT), dtype=jnp.float32) * 0.02).astype(jnp.bfloat16)
    b = jax.random.normal(k_b, (OUT,), dtype=jnp.float32) * 0.01

    # tb=8 -> grid of 2 batch tiles (exercises pipelining over the batch axis).
    out = multilingual_clip_head(embs, att, w_t, b, tb=8)
    out = jax.block_until_ready(out)

    ref = reference(embs, att, w_t, b)
    assert out.shape == (B, OUT)
    assert jnp.allclose(out, ref, atol=2e-2, rtol=2e-2), (
        f"mismatch vs pure-JAX reference: max abs err {jnp.max(jnp.abs(out - ref))}")

    print("KERNEL_OK")
</pallas_src>

<mosaic_0001>
module attributes {stable_mosaic.version = 11 : i64} {
  func.func @mclip_head_kernel(%arg0: i32, %arg1: memref<8x8x768xbf16, #tpu.memory_space<vmem>>, %arg2: memref<8x8xf32, #tpu.memory_space<vmem>>, %arg3: memref<768x640xbf16, #tpu.memory_space<vmem>>, %arg4: memref<1x640xf32, #tpu.memory_space<vmem>>, %arg5: memref<8x640xf32, #tpu.memory_space<vmem>>) attributes {dimension_semantics = [#tpu.dimension_semantics<parallel>], iteration_bounds = array<i64: 2>, scalar_prefetch = 0 : i64, scratch_operands = 0 : i64, tpu.core_type = #tpu.core_type<tc>, window_params = [{transform_indices = @transform_0, window_bounds = array<i64: 8, 8, 768>}, {transform_indices = @transform_1, window_bounds = array<i64: 8, 8>}, {pipeline_mode = #tpu.pipeline_mode<synchronous>, transform_indices = @transform_2, window_bounds = array<i64: 768, 640>}, {pipeline_mode = #tpu.pipeline_mode<synchronous>, transform_indices = @transform_3, window_bounds = array<i64: 1, 640>}, {transform_indices = @transform_4, window_bounds = array<i64: 8, 640>}]} {
    %c0 = arith.constant 0 : index
    %c0_0 = arith.constant 0 : index
    %c0_1 = arith.constant 0 : index
    %0 = vector.load %arg1[%c0, %c0_0, %c0_1] : memref<8x8x768xbf16, #tpu.memory_space<vmem>>, vector<8x8x768xbf16>
    %1 = arith.extf %0 : vector<8x8x768xbf16> to vector<8x8x768xf32>
    %c0_2 = arith.constant 0 : index
    %c0_3 = arith.constant 0 : index
    %2 = vector.load %arg2[%c0_2, %c0_3] : memref<8x8xf32, #tpu.memory_space<vmem>>, vector<8x8xf32>
    %3 = vector.shape_cast %2 : vector<8x8xf32> to vector<8x8x1xf32>
    %4 = vector.broadcast %3 : vector<8x8x1xf32> to vector<8x8x768xf32>
    %5 = arith.mulf %1, %4 : vector<8x8x768xf32>
    %cst = arith.constant dense<0.000000e+00> : vector<8x768xf32>
    %6 = vector.multi_reduction <add>, %5, %cst [1] : vector<8x8x768xf32> to vector<8x768xf32>
    %7 = arith.truncf %6 : vector<8x768xf32> to vector<8x768xbf16>
    %c0_4 = arith.constant 0 : index
    %c0_5 = arith.constant 0 : index
    %8 = vector.load %arg3[%c0_4, %c0_5] : memref<768x640xbf16, #tpu.memory_space<vmem>>, vector<768x640xbf16>
    %cst_6 = arith.constant dense<0.000000e+00> : vector<8x640xf32>
    %9 = tpu.matmul %7, %8, %cst_6 {dimension_numbers = #tpu.dot_dimension_numbers<[1], [0], [0], [1], [0, 0, 1, 1], [], []>} : vector<8x768xbf16>, vector<768x640xbf16>, vector<8x640xf32> -> vector<8x640xf32>
    %c0_7 = arith.constant 0 : index
    %c0_8 = arith.constant 0 : index
    %10 = vector.load %arg4[%c0_7, %c0_8] : memref<1x640xf32, #tpu.memory_space<vmem>>, vector<1x640xf32>
    %11 = vector.broadcast %10 : vector<1x640xf32> to vector<8x640xf32>
    %12 = arith.addf %9, %11 : vector<8x640xf32>
    %c0_9 = arith.constant 0 : index
    %c0_10 = arith.constant 0 : index
    %13 = vector.load %arg5[%c0_9, %c0_10] : memref<8x640xf32, #tpu.memory_space<vmem>>, vector<8x640xf32>
    tpu.vector_store %arg5[%c0_9, %c0_10], %12 {strides = array<i32>} : memref<8x640xf32, #tpu.memory_space<vmem>>, vector<8x640xf32>,
    return
  }
  func.func @transform_0(%arg0: i32) -> (i32, i32, i32) {
    %c0_i32 = arith.constant 0 : i32
    %c0_i32_0 = arith.constant 0 : i32
    %c0_i32_1 = arith.constant 0 : i32
    return %arg0, %c0_i32, %c0_i32_0 : i32, i32, i32
  }
  func.func @transform_1(%arg0: i32) -> (i32, i32) {
    %c0_i32 = arith.constant 0 : i32
    %c0_i32_0 = arith.constant 0 : i32
    return %arg0, %c0_i32 : i32, i32
  }
  func.func @transform_2(%arg0: i32) -> (i32, i32) {
    %c0_i32 = arith.constant 0 : i32
    %c0_i32_0 = arith.constant 0 : i32
    %c0_i32_1 = arith.constant 0 : i32
    return %c0_i32, %c0_i32_0 : i32, i32
  }
  func.func @transform_3(%arg0: i32) -> (i32, i32) {
    %c0_i32 = arith.constant 0 : i32
    %c0_i32_0 = arith.constant 0 : i32
    %c0_i32_1 = arith.constant 0 : i32
    return %c0_i32, %c0_i32_0 : i32, i32
  }
  func.func @transform_4(%arg0: i32) -> (i32, i32) {
    %c0_i32 = arith.constant 0 : i32
    %c0_i32_0 = arith.constant 0 : i32
    return %arg0, %c0_i32 : i32, i32
  }
}

</mosaic_0001>

<llo_original>
// kernel: tpu_custom_call.1
$region0: #{tpu_custom_call.1}
  #allocation0 [shape = 'u32[]', space=smem, size = 0x4, offset = 0x4, fixed_abs, tag = 'smem constant byte address 0x4 - core index']
  #allocation1 [shape = 'u32[72,128]{1,0:T(1,128)}', space=vmem, size = 0x9000, scoped, tag = 'internal scratch']
  %s0 = inlined_call_operand.hbm [shape: bf16[16,8,768], index: 0, kind: input, shape index: {}]
  %s1 = inlined_call_operand.vmem [shape: f32[16,8], index: 1, kind: input, shape index: {}]
  %s2 = inlined_call_operand.hbm [shape: bf16[768,640], index: 2, kind: input, shape index: {}]
  %s3 = inlined_call_operand.vmem [shape: f32[1,640], index: 3, kind: input, shape index: {}]
  %s4 = inlined_call_operand.hbm [shape: f32[16,640], index: 4, kind: output, shape index: {}]
  %s5 = sld [smem:[#allocation0]]
  $region57: #{tpu_custom_call.1} parent=0
    _
  %s7 = ssub.s32 1, %s5
  %s8 = scalar_select 0, %s7, %s5
  $region1: #{tpu_custom_call.1} parent=0
    #allocation2 [shape = 'u8[196608]{0}', space=vmem, size = 0x30000, scoped, tag = 'input window, operand 0']
    #allocation3 [shape = 's32[2]{0}', space=sflag, size = 0x8, scoped, tag = 'scoped memory for tpu_custom_call.1']
    #allocation4 [shape = 's32[2]{0}', space=sflag, size = 0x8, scoped, tag = 'scoped memory for tpu_custom_call.1']
    #allocation5 [shape = 'u8[983040]{0}', space=vmem, size = 0xf0000, scoped, tag = 'input window, operand 2, single buffered']
    #allocation6 [shape = 's32[1]{0}', space=sflag, size = 0x4, scoped, tag = 'scoped memory for tpu_custom_call.1']
    #allocation7 [shape = 'u8[40960]{0}', space=vmem, size = 0xa000, scoped, tag = 'output window, operand 0']
    %9 = vsyncpa [#allocation3], 0
    %s10 = scalar_lea.sflag [#allocation3], 1
    %11 = vsyncpa %s10, 0
    %12 = vsyncpa [#allocation6], 0
    %13 = vsyncpa [#allocation4], 0
    %s14 = scalar_lea.sflag [#allocation4], 1
    %15 = vsyncpa %s14, 0
    loop: start=0, step=1, limit=4
    $region2: #{tpu_custom_call.1} parent=1 // loop_pre_header
      _
    $region3: #{tpu_custom_call.1} parent=1 // loop_header
      %s17 = sphi 0, %s21
      %p18 = scmp.ge.s32.totalorder %s17, 4
      %s27 = sphi 0, %s29
      %s30 = sphi 0, %s27
      %s31 = sphi 0, %s30
      %s47 = sphi 0, %s31
      %s53 = sphi 0, %s55
      %s56 = sphi 0, %s53
      %s57 = sphi 0, %s56
      %s73 = sphi 0, %s57
      %s77 = sphi 0, %s77
      %s79 = sphi 0, %s77
      %s80 = sphi 0, %s79
      %s94 = sphi 0, %s80
      %s98 = sphi 0, %s98
      %s100 = sphi 0, %s98
      %s101 = sphi 0, %s100
      %s115 = sphi 0, %s101
      %s121 = sphi 0, %s123
      %s124 = sphi 0, %s121
      %s125 = sphi 0, %s124
      %s141 = sphi 0, %s125
    $region4: #{tpu_custom_call.1} parent=1 // loop_header_branch
      %20 = sbr.rel (%p18) target = $region8
    $region5: #{tpu_custom_call.1} parent=1 // loop_body
      %s22 = ssub.s32 %s17, 1
      %s23 = ssub.s32 %s17, 2
      %s24 = sadd.s32 %s17, 1
      %s25 = ssub.s32 %s17, %s24
      %p26 = scmp.eq.s32.totalorder %s25, 0
      %s28 = sadd.s32 %s27, 1
      %s29 = scalar_select %p26, %s27, %s28
      %p32 = pneg %p26
      %p33 = scmp.eq.s32.totalorder %s17, 1
      %p34 = por %p32, %p33
      %p35 = scmp.ne.s32.totalorder %s27, %s30
      %p36 = scmp.eq.s32.totalorder %s17, 0
      %p37 = por %p35, %p36
      %p38 = scmp.ne.s32.totalorder %s27, %s30
      %p39 = scmp.eq.s32.totalorder %s22, 1
      %p40 = por %p38, %p39
      %p41 = scmp.ne.s32.totalorder %s30, %s31
      %p42 = scmp.eq.s32.totalorder %s22, 0
      %p43 = por %p41, %p42
      %p44 = scmp.ne.s32.totalorder %s30, %s31
      %p45 = scmp.eq.s32.totalorder %s23, 1
      %p46 = por %p44, %p45
      %p48 = scmp.ne.s32.totalorder %s31, %s47
      %p49 = scmp.eq.s32.totalorder %s23, 0
      %p50 = por %p48, %p49
      %s51 = ssub.s32 %s17, %s24
      %p52 = scmp.eq.s32.totalorder %s51, 0
      %s54 = sadd.s32 %s53, 1
      %s55 = scalar_select %p52, %s53, %s54
      %p58 = pneg %p52
      %p59 = scmp.eq.s32.totalorder %s17, 1
      %p60 = por %p58, %p59
      %p61 = scmp.ne.s32.totalorder %s53, %s56
      %p62 = scmp.eq.s32.totalorder %s17, 0
      %p63 = por %p61, %p62
      %p64 = scmp.ne.s32.totalorder %s53, %s56
      %p65 = scmp.eq.s32.totalorder %s22, 1
      %p66 = por %p64, %p65
      %p67 = scmp.ne.s32.totalorder %s56, %s57
      %p68 = scmp.eq.s32.totalorder %s22, 0
      %p69 = por %p67, %p68
      %p70 = scmp.ne.s32.totalorder %s56, %s57
      %p71 = scmp.eq.s32.totalorder %s23, 1
      %p72 = por %p70, %p71
      %p74 = scmp.ne.s32.totalorder %s57, %s73
      %p75 = scmp.eq.s32.totalorder %s23, 0
      %p76 = por %p74, %p75
      %s78 = sadd.s32 %s77, 1
      %p81 = scmp.eq.s32.totalorder %s17, 1
      %p82 = scmp.ne.s32.totalorder %s77, %s79
      %p83 = scmp.eq.s32.totalorder %s17, 0
      %p84 = por %p82, %p83
      %p85 = scmp.ne.s32.totalorder %s77, %s79
      %p86 = scmp.eq.s32.totalorder %s22, 1
      %p87 = por %p85, %p86
      %p88 = scmp.ne.s32.totalorder %s79, %s80
      %p89 = scmp.eq.s32.totalorder %s22, 0
      %p90 = por %p88, %p89
      %p91 = scmp.ne.s32.totalorder %s79, %s80
      %p92 = scmp.eq.s32.totalorder %s23, 1
      %p93 = por %p91, %p92
      %p95 = scmp.ne.s32.totalorder %s80, %s94
      %p96 = scmp.eq.s32.totalorder %s23, 0
      %p97 = por %p95, %p96
      %s99 = sadd.s32 %s98, 1
      %p102 = scmp.eq.s32.totalorder %s17, 1
      %p103 = scmp.ne.s32.totalorder %s98, %s100
      %p104 = scmp.eq.s32.totalorder %s17, 0
      %p105 = por %p103, %p104
      %p106 = scmp.ne.s32.totalorder %s98, %s100
      %p107 = scmp.eq.s32.totalorder %s22, 1
      %p108 = por %p106, %p107
      %p109 = scmp.ne.s32.totalorder %s100, %s101
      %p110 = scmp.eq.s32.totalorder %s22, 0
      %p111 = por %p109, %p110
      %p112 = scmp.ne.s32.totalorder %s100, %s101
      %p113 = scmp.eq.s32.totalorder %s23, 1
      %p114 = por %p112, %p113
      %p116 = scmp.ne.s32.totalorder %s101, %s115
      %p117 = scmp.eq.s32.totalorder %s23, 0
      %p118 = por %p116, %p117
      %s119 = ssub.s32 %s17, %s24
      %p120 = scmp.eq.s32.totalorder %s119, 0
      %s122 = sadd.s32 %s121, 1
      %s123 = scalar_select %p120, %s121, %s122
      %p126 = pneg %p120
      %p127 = scmp.eq.s32.totalorder %s17, 1
      %p128 = por %p126, %p127
      %p129 = scmp.ne.s32.totalorder %s121, %s124
      %p130 = scmp.eq.s32.totalorder %s17, 0
      %p131 = por %p129, %p130
      %p132 = scmp.ne.s32.totalorder %s121, %s124
      %p133 = scmp.eq.s32.totalorder %s22, 1
      %p134 = por %p132, %p133
      %p135 = scmp.ne.s32.totalorder %s124, %s125
      %p136 = scmp.eq.s32.totalorder %s22, 0
      %p137 = por %p135, %p136
      %p138 = scmp.ne.s32.totalorder %s124, %s125
      %p139 = scmp.eq.s32.totalorder %s23, 1
      %p140 = por %p138, %p139
      %p142 = scmp.ne.s32.totalorder %s125, %s141
      %p143 = scmp.eq.s32.totalorder %s23, 0
      %p144 = por %p142, %p143
      %p145 = scmp.le.s32.totalorder 1, %s17
      %p146 = scmp.lt.s32.totalorder %s17, 3
      %p147 = pnand %p145, %p146
      %p148 = pneg %p147
      // Predicated region
      $region9: #{tpu_custom_call.1} parent=5 // pred_check
        _
      $region10: #{tpu_custom_call.1} parent=5 // pred_check_branch
        %150 = sbr.rel (%p147) target = $region12
      $region11: #{tpu_custom_call.1} parent=5 // pred_region
        %s151 = ssub.s32 %s17, 1
        // Predicated region
        $region13: #{tpu_custom_call.1} parent=11 // pred_check
          %p152 = pneg %p90
        $region14: #{tpu_custom_call.1} parent=11 // pred_check_branch
          %154 = sbr.rel (%p152) target = $region16
        $region15: #{tpu_custom_call.1} parent=11 // pred_region
          %156 = vsyncadd [#allocation6], 0
          %s157 = sshll.u32 %s2, 4
          %s158 = int_to_ptr.hbm [resolvable:$true] %s157
          %s159 = sshll.u32 [#allocation5], 4
          %s160 = int_to_ptr.vmem [resolvable:$true] %s159
          %165 = dma.hbm_to_vmem [thread:$0]  %s158, 30720, %s160, [#allocation6], 320, 320, 20
        $region16: #{tpu_custom_call.1} parent=11 // pred_fallthru
          _
        // Predicated region
        $region17: #{tpu_custom_call.1} parent=11 // pred_check
          %p166 = pneg %p111
        $region18: #{tpu_custom_call.1} parent=11 // pred_check_branch
          %168 = sbr.rel (%p166) target = $region20
        $region19: #{tpu_custom_call.1} parent=11 // pred_region
          _
        $region20: #{tpu_custom_call.1} parent=11 // pred_fallthru
          _
      $region12: #{tpu_custom_call.1} parent=5 // pred_fallthru
        _
      %p169 = scmp.lt.s32.totalorder %s17, 2
      // Predicated region
      $region21: #{tpu_custom_call.1} parent=5 // pred_check
        %p170 = pneg %p169
      $region22: #{tpu_custom_call.1} parent=5 // pred_check_branch
        %172 = sbr.rel (%p170) target = $region24
      $region23: #{tpu_custom_call.1} parent=5 // pred_region
        // Predicated region
        $region25: #{tpu_custom_call.1} parent=23 // pred_check
          %p173 = pneg %p37
        $region26: #{tpu_custom_call.1} parent=23 // pred_check_branch
          %175 = sbr.rel (%p173) target = $region28
        $region27: #{tpu_custom_call.1} parent=23 // pred_region
          %s176 = sand.u32 %s27, 1
          %s177 = scalar_lea.sflag [#allocation3], %s176
          %s178 = sand.u32 %s27, 1
          %s179 = smul.addr %s178, 192
          %s180 = scalar_lea.vmem [#allocation2], %s179
          %s181 = smul.u32 8, %s17
          %183 = vsyncadd %s177, 0
          %s184 = smul.addr %s181, 6
          %s185 = smul.addr %s184, 4
          %s186 = scalar_lea.hbm %s0, %s185
          %s187 = sshll.u32 %s186, 4
          %s188 = int_to_ptr.hbm [resolvable:$true] %s187
          %s189 = sshll.u32 %s180, 4
          %s190 = int_to_ptr.vmem [resolvable:$true] %s189
          %195 = dma.hbm_to_vmem [thread:$0]  %s188, 3072, %s190, %s177, 384, 384, 24
        $region28: #{tpu_custom_call.1} parent=23 // pred_fallthru
          _
        // Predicated region
        $region29: #{tpu_custom_call.1} parent=23 // pred_check
          %p196 = pneg %p63
        $region30: #{tpu_custom_call.1} parent=23 // pred_check_branch
          %198 = sbr.rel (%p196) target = $region32
        $region31: #{tpu_custom_call.1} parent=23 // pred_region
          %p199 = scmp.lt.s32.totalorder %s17, 1
          %s200 = scalar_select %p199, %s17, 1
          %s201 = smul.addr %s200, 8
          %s202 = scalar_lea.vmem %s1, %s201
        $region32: #{tpu_custom_call.1} parent=23 // pred_fallthru
          _
      $region24: #{tpu_custom_call.1} parent=5 // pred_fallthru
        _
      %p203 = scmp.le.s32.totalorder 1, %s17
      %p204 = scmp.lt.s32.totalorder %s17, 3
      %p205 = pnand %p203, %p204
      %p206 = pneg %p205
      // Predicated region
      $region33: #{tpu_custom_call.1} parent=5 // pred_check
        _
      $region34: #{tpu_custom_call.1} parent=5 // pred_check_branch
        %208 = sbr.rel (%p205) target = $region36
      $region35: #{tpu_custom_call.1} parent=5 // pred_region
        %s209 = ssub.s32 %s17, 1
        %s210 = sand.u32 %s30, 1
        %s211 = scalar_lea.sflag [#allocation3], %s210
        %s212 = sand.u32 %s30, 1
        %s213 = smul.addr %s212, 192
        %s214 = scalar_lea.vmem [#allocation2], %s213
        // Predicated region
        $region37: #{tpu_custom_call.1} parent=35 // pred_check
          %p215 = pneg %p43
        $region38: #{tpu_custom_call.1} parent=35 // pred_check_branch
          %217 = sbr.rel (%p215) target = $region40
        $region39: #{tpu_custom_call.1} parent=35 // pred_region
          %219 = dma.done %s211, 3072
        $region40: #{tpu_custom_call.1} parent=35 // pred_fallthru
          _
        // Predicated region
        $region41: #{tpu_custom_call.1} parent=35 // pred_check
          %p220 = pneg %p90
        $region42: #{tpu_custom_call.1} parent=35 // pred_check_branch
          %222 = sbr.rel (%p220) target = $region44
        $region43: #{tpu_custom_call.1} parent=35 // pred_region
          %224 = dma.done [#allocation6], 30720
        $region44: #{tpu_custom_call.1} parent=35 // pred_fallthru
          _
        %s225 = sand.u32 %s30, 1
        %s226 = scalar_lea.sflag [#allocation3], %s225
        %s227 = sand.u32 %s30, 1
        %s228 = smul.addr %s227, 192
        %s229 = scalar_lea.vmem [#allocation2], %s228
        %p230 = pneg %p43
        %p231 = pneg %p40
        %p232 = scmp.lt.s32.totalorder %s22, 1
        %s233 = scalar_select %p232, %s22, 1
        %s234 = smul.addr %s233, 8
        %s235 = scalar_lea.vmem %s1, %s234
        %p236 = pneg %p69
        %p237 = pneg %p66
        %p238 = pneg %p90
        %p239 = pneg %p87
        %p240 = pneg %p111
        %p241 = pneg %p108
        %p242 = pneg %p137
        %p243 = pneg %p134
        %s244 = sand.u32 %s124, 1
        %s245 = scalar_lea.sflag [#allocation4], %s244
        %s246 = sand.u32 %s124, 1
        %s247 = smul.addr %s246, 40
        %s248 = scalar_lea.vmem [#allocation7], %s247
        %s249 = smul.u32 8, %s22
        %p250 = scmp.lt.s32.totalorder %s22, 1
        %s251 = scalar_select %p250, %s22, 1
        %s252 = smul.addr %s251, 8
        %s253 = scalar_lea.vmem %s1, %s252
        %v254 = vld [vmem:[%s214] sm:$0xff]
        %v255 = vld [vmem:[%s214 + $0x8] sm:$0xff]
        %v256 = vld [vmem:[%s214 + $0x10] sm:$0xff]
        %v257 = vld [vmem:[%s214 + $0x18] sm:$0xff]
        %v258 = vld [vmem:[%s214 + $0x20] sm:$0xff]
        %v259 = vld [vmem:[%s214 + $0x28] sm:$0xff]
        %v260 = vld [vmem:[%s214 + $0x30] sm:$0xff]
        %v261 = vld [vmem:[%s214 + $0x38] sm:$0xff]
        %v262 = vld [vmem:[%s214 + $0x40] sm:$0xff]
        %v263 = vld [vmem:[%s214 + $0x48] sm:$0xff]
        %v264 = vld [vmem:[%s214 + $0x50] sm:$0xff]
        %v265 = vld [vmem:[%s214 + $0x58] sm:$0xff]
        %v266 = vld [vmem:[%s214 + $0x60] sm:$0xff]
        %v267 = vld [vmem:[%s214 + $0x68] sm:$0xff]
        %v268 = vld [vmem:[%s214 + $0x70] sm:$0xff]
        %v269 = vld [vmem:[%s214 + $0x78] sm:$0xff]
        %v270 = vld [vmem:[%s214 + $0x80] sm:$0xff]
        %v271 = vld [vmem:[%s214 + $0x88] sm:$0xff]
        %v272 = vld [vmem:[%s214 + $0x90] sm:$0xff]
        %v273 = vld [vmem:[%s214 + $0x98] sm:$0xff]
        %v274 = vld [vmem:[%s214 + $0xa0] sm:$0xff]
        %v275 = vld [vmem:[%s214 + $0xa8] sm:$0xff]
        %v276 = vld [vmem:[%s214 + $0xb0] sm:$0xff]
        %v277 = vld [vmem:[%s214 + $0xb8] sm:$0xff]
        %v278 = vunpack.c.l.bf16 %v254
        %v279 = vunpack.c.h.bf16 %v254
        %v280 = vunpack.c.l.bf16 %v255
        %v281 = vunpack.c.h.bf16 %v255
        %v282 = vunpack.c.l.bf16 %v256
        %v283 = vunpack.c.h.bf16 %v256
        %v284 = vunpack.c.l.bf16 %v257
        %v285 = vunpack.c.h.bf16 %v257
        %v286 = vunpack.c.l.bf16 %v258
        %v287 = vunpack.c.h.bf16 %v258
        %v288 = vunpack.c.l.bf16 %v259
        %v289 = vunpack.c.h.bf16 %v259
        %v290 = vunpack.c.l.bf16 %v260
        %v291 = vunpack.c.h.bf16 %v260
        %v292 = vunpack.c.l.bf16 %v261
        %v293 = vunpack.c.h.bf16 %v261
        %v294 = vunpack.c.l.bf16 %v262
        %v295 = vunpack.c.h.bf16 %v262
        %v296 = vunpack.c.l.bf16 %v263
        %v297 = vunpack.c.h.bf16 %v263
        %v298 = vunpack.c.l.bf16 %v264
        %v299 = vunpack.c.h.bf16 %v264
        %v300 = vunpack.c.l.bf16 %v265
        %v301 = vunpack.c.h.bf16 %v265
        %v302 = vunpack.c.l.bf16 %v266
        %v303 = vunpack.c.h.bf16 %v266
        %v304 = vunpack.c.l.bf16 %v267
        %v305 = vunpack.c.h.bf16 %v267
        %v306 = vunpack.c.l.bf16 %v268
        %v307 = vunpack.c.h.bf16 %v268
        %v308 = vunpack.c.l.bf16 %v269
        %v309 = vunpack.c.h.bf16 %v269
        %v310 = vunpack.c.l.bf16 %v270
        %v311 = vunpack.c.h.bf16 %v270
        %v312 = vunpack.c.l.bf16 %v271
        %v313 = vunpack.c.h.bf16 %v271
        %v314 = vunpack.c.l.bf16 %v272
        %v315 = vunpack.c.h.bf16 %v272
        %v316 = vunpack.c.l.bf16 %v273
        %v317 = vunpack.c.h.bf16 %v273
        %v318 = vunpack.c.l.bf16 %v274
        %v319 = vunpack.c.h.bf16 %v274
        %v320 = vunpack.c.l.bf16 %v275
        %v321 = vunpack.c.h.bf16 %v275
        %v322 = vunpack.c.l.bf16 %v276
        %v323 = vunpack.c.h.bf16 %v276
        %v324 = vunpack.c.l.bf16 %v277
        %v325 = vunpack.c.h.bf16 %v277
        %v326 = vld [vmem:[%s253] sm:$0xff]
        %v327 = vperm.slane %v326, 0
        %v328 = vlaneseq
        %v329 = vshrl.u32 %v328, 7
        %331 = vset.pattern.permute.xlu0 %v329
        %332 = vperm.xlu0 %331, %v327
        %v333 = vpop.permute.xlu0 %332
        %v334 = vperm.slane %v326, 1
        %v335 = vlaneseq
        %v336 = vshrl.u32 %v335, 7
        %338 = vset.pattern.permute.xlu0 %v336
        %339 = vperm.xlu0 %338, %v334
        %v340 = vpop.permute.xlu0 %339
        %v341 = vperm.slane %v326, 2
        %v342 = vlaneseq
        %v343 = vshrl.u32 %v342, 7
        %345 = vset.pattern.permute.xlu0 %v343
        %346 = vperm.xlu0 %345, %v341
        %v347 = vpop.permute.xlu0 %346
        %v348 = vperm.slane %v326, 3
        %v349 = vlaneseq
        %v350 = vshrl.u32 %v349, 7
        %352 = vset.pattern.permute.xlu0 %v350
        %353 = vperm.xlu0 %352, %v348
        %v354 = vpop.permute.xlu0 %353
        %v355 = vperm.slane %v326, 4
        %v356 = vlaneseq
        %v357 = vshrl.u32 %v356, 7
        %359 = vset.pattern.permute.xlu0 %v357
        %360 = vperm.xlu0 %359, %v355
        %v361 = vpop.permute.xlu0 %360
        %v362 = vperm.slane %v326, 5
        %v363 = vlaneseq
        %v364 = vshrl.u32 %v363, 7
        %366 = vset.pattern.permute.xlu0 %v364
        %367 = vperm.xlu0 %366, %v362
        %v368 = vpop.permute.xlu0 %367
        %v369 = vperm.slane %v326, 6
        %v370 = vlaneseq
        %v371 = vshrl.u32 %v370, 7
        %373 = vset.pattern.permute.xlu0 %v371
        %374 = vperm.xlu0 %373, %v369
        %v375 = vpop.permute.xlu0 %374
        %v376 = vperm.slane %v326, 7
        %v377 = vlaneseq
        %v378 = vshrl.u32 %v377, 7
        %380 = vset.pattern.permute.xlu0 %v378
        %381 = vperm.xlu0 %380, %v376
        %v382 = vpop.permute.xlu0 %381
        %v383 = vmul.f32 %v278, %v333
        %v384 = vmul.f32 %v279, %v333
        %v385 = vmul.f32 %v280, %v333
        %v386 = vmul.f32 %v281, %v333
        %v387 = vmul.f32 %v282, %v333
        %v388 = vmul.f32 %v283, %v333
        %v389 = vmul.f32 %v284, %v340
        %v390 = vmul.f32 %v285, %v340
        %v391 = vmul.f32 %v286, %v340
        %v392 = vmul.f32 %v287, %v340
        %v393 = vmul.f32 %v288, %v340
        %v394 = vmul.f32 %v289, %v340
        %v395 = vmul.f32 %v290, %v347
        %v396 = vmul.f32 %v291, %v347
        %v397 = vmul.f32 %v292, %v347
        %v398 = vmul.f32 %v293, %v347
        %v399 = vmul.f32 %v294, %v347
        %v400 = vmul.f32 %v295, %v347
        %v401 = vmul.f32 %v296, %v354
        %v402 = vmul.f32 %v297, %v354
        %v403 = vmul.f32 %v298, %v354
        %v404 = vmul.f32 %v299, %v354
        %v405 = vmul.f32 %v300, %v354
        %v406 = vmul.f32 %v301, %v354
        %v407 = vmul.f32 %v302, %v361
        %v408 = vmul.f32 %v303, %v361
        %v409 = vmul.f32 %v304, %v361
        %v410 = vmul.f32 %v305, %v361
        %v411 = vmul.f32 %v306, %v361
        %v412 = vmul.f32 %v307, %v361
        %v413 = vmul.f32 %v308, %v368
        %v414 = vmul.f32 %v309, %v368
        %v415 = vmul.f32 %v310, %v368
        %v416 = vmul.f32 %v311, %v368
        %v417 = vmul.f32 %v312, %v368
        %v418 = vmul.f32 %v313, %v368
        %v419 = vmul.f32 %v314, %v375
        %v420 = vmul.f32 %v315, %v375
        %v421 = vmul.f32 %v316, %v375
        %v422 = vmul.f32 %v317, %v375
        %v423 = vmul.f32 %v318, %v375
        %v424 = vmul.f32 %v319, %v375
        %v425 = vmul.f32 %v320, %v382
        %v426 = vmul.f32 %v321, %v382
        %v427 = vmul.f32 %v322, %v382
        %v428 = vmul.f32 %v323, %v382
        %v429 = vmul.f32 %v324, %v382
        %v430 = vmul.f32 %v325, %v382
        %v431 = vrot.slane %v383, 4
        %v432 = vadd.f32 %v383, %v431
        %v433 = vrot.slane %v432, 2
        %v434 = vadd.f32 %v432, %v433
        %v435 = vrot.slane %v434, 1
        %v436 = vadd.f32 %v434, %v435
        %v437 = vrot.slane %v384, 4
        %v438 = vadd.f32 %v384, %v437
        %v439 = vrot.slane %v438, 2
        %v440 = vadd.f32 %v438, %v439
        %v441 = vrot.slane %v440, 1
        %v442 = vadd.f32 %v440, %v441
        %v443 = vrot.slane %v385, 4
        %v444 = vadd.f32 %v385, %v443
        %v445 = vrot.slane %v444, 2
        %v446 = vadd.f32 %v444, %v445
        %v447 = vrot.slane %v446, 1
        %v448 = vadd.f32 %v446, %v447
        %v449 = vrot.slane %v386, 4
        %v450 = vadd.f32 %v386, %v449
        %v451 = vrot.slane %v450, 2
        %v452 = vadd.f32 %v450, %v451
        %v453 = vrot.slane %v452, 1
        %v454 = vadd.f32 %v452, %v453
        %v455 = vrot.slane %v387, 4
        %v456 = vadd.f32 %v387, %v455
        %v457 = vrot.slane %v456, 2
        %v458 = vadd.f32 %v456, %v457
        %v459 = vrot.slane %v458, 1
        %v460 = vadd.f32 %v458, %v459
        %v461 = vrot.slane %v388, 4
        %v462 = vadd.f32 %v388, %v461
        %v463 = vrot.slane %v462, 2
        %v464 = vadd.f32 %v462, %v463
        %v465 = vrot.slane %v464, 1
        %v466 = vadd.f32 %v464, %v465
        %v467 = vrot.slane %v389, 4
        %v468 = vadd.f32 %v389, %v467
        %v469 = vrot.slane %v468, 2
        %v470 = vadd.f32 %v468, %v469
        %v471 = vrot.slane %v470, 1
        %v472 = vadd.f32 %v470, %v471
        %v473 = vrot.slane %v390, 4
        %v474 = vadd.f32 %v390, %v473
        %v475 = vrot.slane %v474, 2
        %v476 = vadd.f32 %v474, %v475
        %v477 = vrot.slane %v476, 1
        %v478 = vadd.f32 %v476, %v477
        %v479 = vrot.slane %v391, 4
        %v480 = vadd.f32 %v391, %v479
        %v481 = vrot.slane %v480, 2
        %v482 = vadd.f32 %v480, %v481
        %v483 = vrot.slane %v482, 1
        %v484 = vadd.f32 %v482, %v483
        %v485 = vrot.slane %v392, 4
        %v486 = vadd.f32 %v392, %v485
        %v487 = vrot.slane %v486, 2
        %v488 = vadd.f32 %v486, %v487
        %v489 = vrot.slane %v488, 1
        %v490 = vadd.f32 %v488, %v489
        %v491 = vrot.slane %v393, 4
        %v492 = vadd.f32 %v393, %v491
        %v493 = vrot.slane %v492, 2
        %v494 = vadd.f32 %v492, %v493
        %v495 = vrot.slane %v494, 1
        %v496 = vadd.f32 %v494, %v495
        %v497 = vrot.slane %v394, 4
        %v498 = vadd.f32 %v394, %v497
        %v499 = vrot.slane %v498, 2
        %v500 = vadd.f32 %v498, %v499
        %v501 = vrot.slane %v500, 1
        %v502 = vadd.f32 %v500, %v501
        %v503 = vrot.slane %v395, 4
        %v504 = vadd.f32 %v395, %v503
        %v505 = vrot.slane %v504, 2
        %v506 = vadd.f32 %v504, %v505
        %v507 = vrot.slane %v506, 1
        %v508 = vadd.f32 %v506, %v507
        %v509 = vrot.slane %v396, 4
        %v510 = vadd.f32 %v396, %v509
        %v511 = vrot.slane %v510, 2
        %v512 = vadd.f32 %v510, %v511
        %v513 = vrot.slane %v512, 1
        %v514 = vadd.f32 %v512, %v513
        %v515 = vrot.slane %v397, 4
        %v516 = vadd.f32 %v397, %v515
        %v517 = vrot.slane %v516, 2
        %v518 = vadd.f32 %v516, %v517
        %v519 = vrot.slane %v518, 1
        %v520 = vadd.f32 %v518, %v519
        %v521 = vrot.slane %v398, 4
        %v522 = vadd.f32 %v398, %v521
        %v523 = vrot.slane %v522, 2
        %v524 = vadd.f32 %v522, %v523
        %v525 = vrot.slane %v524, 1
        %v526 = vadd.f32 %v524, %v525
        %v527 = vrot.slane %v399, 4
        %v528 = vadd.f32 %v399, %v527
        %v529 = vrot.slane %v528, 2
        %v530 = vadd.f32 %v528, %v529
        %v531 = vrot.slane %v530, 1
        %v532 = vadd.f32 %v530, %v531
        %v533 = vrot.slane %v400, 4
        %v534 = vadd.f32 %v400, %v533
        %v535 = vrot.slane %v534, 2
        %v536 = vadd.f32 %v534, %v535
        %v537 = vrot.slane %v536, 1
        %v538 = vadd.f32 %v536, %v537
        %v539 = vrot.slane %v401, 4
        %v540 = vadd.f32 %v401, %v539
        %v541 = vrot.slane %v540, 2
        %v542 = vadd.f32 %v540, %v541
        %v543 = vrot.slane %v542, 1
        %v544 = vadd.f32 %v542, %v543
        %v545 = vrot.slane %v402, 4
        %v546 = vadd.f32 %v402, %v545
        %v547 = vrot.slane %v546, 2
        %v548 = vadd.f32 %v546, %v547
        %v549 = vrot.slane %v548, 1
        %v550 = vadd.f32 %v548, %v549
        %v551 = vrot.slane %v403, 4
        %v552 = vadd.f32 %v403, %v551
        %v553 = vrot.slane %v552, 2
        %v554 = vadd.f32 %v552, %v553
        %v555 = vrot.slane %v554, 1
        %v556 = vadd.f32 %v554, %v555
        %v557 = vrot.slane %v404, 4
        %v558 = vadd.f32 %v404, %v557
        %v559 = vrot.slane %v558, 2
        %v560 = vadd.f32 %v558, %v559
        %v561 = vrot.slane %v560, 1
        %v562 = vadd.f32 %v560, %v561
        %v563 = vrot.slane %v405, 4
        %v564 = vadd.f32 %v405, %v563
        %v565 = vrot.slane %v564, 2
        %v566 = vadd.f32 %v564, %v565
        %v567 = vrot.slane %v566, 1
        %v568 = vadd.f32 %v566, %v567
        %v569 = vrot.slane %v406, 4
        %v570 = vadd.f32 %v406, %v569
        %v571 = vrot.slane %v570, 2
        %v572 = vadd.f32 %v570, %v571
        %v573 = vrot.slane %v572, 1
        %v574 = vadd.f32 %v572, %v573
        %v575 = vrot.slane %v407, 4
        %v576 = vadd.f32 %v407, %v575
        %v577 = vrot.slane %v576, 2
        %v578 = vadd.f32 %v576, %v577
        %v579 = vrot.slane %v578, 1
        %v580 = vadd.f32 %v578, %v579
        %v581 = vrot.slane %v408, 4
        %v582 = vadd.f32 %v408, %v581
        %v583 = vrot.slane %v582, 2
        %v584 = vadd.f32 %v582, %v583
        %v585 = vrot.slane %v584, 1
        %v586 = vadd.f32 %v584, %v585
        %v587 = vrot.slane %v409, 4
        %v588 = vadd.f32 %v409, %v587
        %v589 = vrot.slane %v588, 2
        %v590 = vadd.f32 %v588, %v589
        %v591 = vrot.slane %v590, 1
        %v592 = vadd.f32 %v590, %v591
        %v593 = vrot.slane %v410, 4
        %v594 = vadd.f32 %v410, %v593
        %v595 = vrot.slane %v594, 2
        %v596 = vadd.f32 %v594, %v595
        %v597 = vrot.slane %v596, 1
        %v598 = vadd.f32 %v596, %v597
        %v599 = vrot.slane %v411, 4
        %v600 = vadd.f32 %v411, %v599
        %v601 = vrot.slane %v600, 2
        %v602 = vadd.f32 %v600, %v601
        %v603 = vrot.slane %v602, 1
        %v604 = vadd.f32 %v602, %v603
        %v605 = vrot.slane %v412, 4
        %v606 = vadd.f32 %v412, %v605
        %v607 = vrot.slane %v606, 2
        %v608 = vadd.f32 %v606, %v607
        %v609 = vrot.slane %v608, 1
        %v610 = vadd.f32 %v608, %v609
        %v611 = vrot.slane %v413, 4
        %v612 = vadd.f32 %v413, %v611
        %v613 = vrot.slane %v612, 2
        %v614 = vadd.f32 %v612, %v613
        %v615 = vrot.slane %v614, 1
        %v616 = vadd.f32 %v614, %v615
        %v617 = vrot.slane %v414, 4
        %v618 = vadd.f32 %v414, %v617
        %v619 = vrot.slane %v618, 2
        %v620 = vadd.f32 %v618, %v619
        %v621 = vrot.slane %v620, 1
        %v622 = vadd.f32 %v620, %v621
        %v623 = vrot.slane %v415, 4
        %v624 = vadd.f32 %v415, %v623
        %v625 = vrot.slane %v624, 2
        %v626 = vadd.f32 %v624, %v625
        %v627 = vrot.slane %v626, 1
        %v628 = vadd.f32 %v626, %v627
        %v629 = vrot.slane %v416, 4
        %v630 = vadd.f32 %v416, %v629
        %v631 = vrot.slane %v630, 2
        %v632 = vadd.f32 %v630, %v631
        %v633 = vrot.slane %v632, 1
        %v634 = vadd.f32 %v632, %v633
        %v635 = vrot.slane %v417, 4
        %v636 = vadd.f32 %v417, %v635
        %v637 = vrot.slane %v636, 2
        %v638 = vadd.f32 %v636, %v637
        %v639 = vrot.slane %v638, 1
        %v640 = vadd.f32 %v638, %v639
        %v641 = vrot.slane %v418, 4
        %v642 = vadd.f32 %v418, %v641
        %v643 = vrot.slane %v642, 2
        %v644 = vadd.f32 %v642, %v643
        %v645 = vrot.slane %v644, 1
        %v646 = vadd.f32 %v644, %v645
        %v647 = vrot.slane %v419, 4
        %v648 = vadd.f32 %v419, %v647
        %v649 = vrot.slane %v648, 2
        %v650 = vadd.f32 %v648, %v649
        %v651 = vrot.slane %v650, 1
        %v652 = vadd.f32 %v650, %v651
        %v653 = vrot.slane %v420, 4
        %v654 = vadd.f32 %v420, %v653
        %v655 = vrot.slane %v654, 2
        %v656 = vadd.f32 %v654, %v655
        %v657 = vrot.slane %v656, 1
        %v658 = vadd.f32 %v656, %v657
        %v659 = vrot.slane %v421, 4
        %v660 = vadd.f32 %v421, %v659
        %v661 = vrot.slane %v660, 2
        %v662 = vadd.f32 %v660, %v661
        %v663 = vrot.slane %v662, 1
        %v664 = vadd.f32 %v662, %v663
        %v665 = vrot.slane %v422, 4
        %v666 = vadd.f32 %v422, %v665
        %v667 = vrot.slane %v666, 2
        %v668 = vadd.f32 %v666, %v667
        %v669 = vrot.slane %v668, 1
        %v670 = vadd.f32 %v668, %v669
        %v671 = vrot.slane %v423, 4
        %v672 = vadd.f32 %v423, %v671
        %v673 = vrot.slane %v672, 2
        %v674 = vadd.f32 %v672, %v673
        %v675 = vrot.slane %v674, 1
        %v676 = vadd.f32 %v674, %v675
        %v677 = vrot.slane %v424, 4
        %v678 = vadd.f32 %v424, %v677
        %v679 = vrot.slane %v678, 2
        %v680 = vadd.f32 %v678, %v679
        %v681 = vrot.slane %v680, 1
        %v682 = vadd.f32 %v680, %v681
        %v683 = vrot.slane %v425, 4
        %v684 = vadd.f32 %v425, %v683
        %v685 = vrot.slane %v684, 2
        %v686 = vadd.f32 %v684, %v685
        %v687 = vrot.slane %v686, 1
        %v688 = vadd.f32 %v686, %v687
        %v689 = vrot.slane %v426, 4
        %v690 = vadd.f32 %v426, %v689
        %v691 = vrot.slane %v690, 2
        %v692 = vadd.f32 %v690, %v691
        %v693 = vrot.slane %v692, 1
        %v694 = vadd.f32 %v692, %v693
        %v695 = vrot.slane %v427, 4
        %v696 = vadd.f32 %v427, %v695
        %v697 = vrot.slane %v696, 2
        %v698 = vadd.f32 %v696, %v697
        %v699 = vrot.slane %v698, 1
        %v700 = vadd.f32 %v698, %v699
        %v701 = vrot.slane %v428, 4
        %v702 = vadd.f32 %v428, %v701
        %v703 = vrot.slane %v702, 2
        %v704 = vadd.f32 %v702, %v703
        %v705 = vrot.slane %v704, 1
        %v706 = vadd.f32 %v704, %v705
        %v707 = vrot.slane %v429, 4
        %v708 = vadd.f32 %v429, %v707
        %v709 = vrot.slane %v708, 2
        %v710 = vadd.f32 %v708, %v709
        %v711 = vrot.slane %v710, 1
        %v712 = vadd.f32 %v710, %v711
        %v713 = vrot.slane %v430, 4
        %v714 = vadd.f32 %v430, %v713
        %v715 = vrot.slane %v714, 2
        %v716 = vadd.f32 %v714, %v715
        %v717 = vrot.slane %v716, 1
        %v718 = vadd.f32 %v716, %v717
        %v719 = vpack.c.bf16 %v436, %v436
        %v720 = vpack.c.bf16 %v442, %v442
        %v721 = vpack.c.bf16 %v448, %v448
        %v722 = vpack.c.bf16 %v454, %v454
        %v723 = vpack.c.bf16 %v460, %v460
        %v724 = vpack.c.bf16 %v466, %v466
        %v725 = vpack.c.bf16 %v472, %v472
        %v726 = vpack.c.bf16 %v478, %v478
        %v727 = vpack.c.bf16 %v484, %v484
        %v728 = vpack.c.bf16 %v490, %v490
        %v729 = vpack.c.bf16 %v496, %v496
        %v730 = vpack.c.bf16 %v502, %v502
        %v731 = vpack.c.bf16 %v508, %v508
        %v732 = vpack.c.bf16 %v514, %v514
        %v733 = vpack.c.bf16 %v520, %v520
        %v734 = vpack.c.bf16 %v526, %v526
        %v735 = vpack.c.bf16 %v532, %v532
        %v736 = vpack.c.bf16 %v538, %v538
        %v737 = vpack.c.bf16 %v544, %v544
        %v738 = vpack.c.bf16 %v550, %v550
        %v739 = vpack.c.bf16 %v556, %v556
        %v740 = vpack.c.bf16 %v562, %v562
        %v741 = vpack.c.bf16 %v568, %v568
        %v742 = vpack.c.bf16 %v574, %v574
        %v743 = vpack.c.bf16 %v580, %v580
        %v744 = vpack.c.bf16 %v586, %v586
        %v745 = vpack.c.bf16 %v592, %v592
        %v746 = vpack.c.bf16 %v598, %v598
        %v747 = vpack.c.bf16 %v604, %v604
        %v748 = vpack.c.bf16 %v610, %v610
        %v749 = vpack.c.bf16 %v616, %v616
        %v750 = vpack.c.bf16 %v622, %v622
        %v751 = vpack.c.bf16 %v628, %v628
        %v752 = vpack.c.bf16 %v634, %v634
        %v753 = vpack.c.bf16 %v640, %v640
        %v754 = vpack.c.bf16 %v646, %v646
        %v755 = vpack.c.bf16 %v652, %v652
        %v756 = vpack.c.bf16 %v658, %v658
        %v757 = vpack.c.bf16 %v664, %v664
        %v758 = vpack.c.bf16 %v670, %v670
        %v759 = vpack.c.bf16 %v676, %v676
        %v760 = vpack.c.bf16 %v682, %v682
        %v761 = vpack.c.bf16 %v688, %v688
        %v762 = vpack.c.bf16 %v694, %v694
        %v763 = vpack.c.bf16 %v700, %v700
        %v764 = vpack.c.bf16 %v706, %v706
        %v765 = vpack.c.bf16 %v712, %v712
        %v766 = vpack.c.bf16 %v718, %v718
        %v767 = vld [vmem:[#allocation5] sm:$0xff]
        %v768 = vld [vmem:[#allocation5 + $0x8] sm:$0xff]
        %v769 = vld [vmem:[#allocation5 + $0x10] sm:$0xf]
        %v770 = vld [vmem:[#allocation5 + $0x14] sm:$0xff]
        %v771 = vld [vmem:[#allocation5 + $0x1c] sm:$0xff]
        %v772 = vld [vmem:[#allocation5 + $0x24] sm:$0xf]
        %v773 = vld [vmem:[#allocation5 + $0x28] sm:$0xff]
        %v774 = vld [vmem:[#allocation5 + $0x30] sm:$0xff]
        %v775 = vld [vmem:[#allocation5 + $0x38] sm:$0xf]
        %v776 = vld [vmem:[#allocation5 + $0x3c] sm:$0xff]
        %v777 = vld [vmem:[#allocation5 + $0x44] sm:$0xff]
        %v778 = vld [vmem:[#allocation5 + $0x4c] sm:$0xf]
        %v779 = vld [vmem:[#allocation5 + $0x50] sm:$0xff]
        %v780 = vld [vmem:[#allocation5 + $0x58] sm:$0xff]
        %v781 = vld [vmem:[#allocation5 + $0x60] sm:$0xf]
        %v782 = vld [vmem:[#allocation5 + $0x64] sm:$0xff]
        %v783 = vld [vmem:[#allocation5 + $0x6c] sm:$0xff]
        %v784 = vld [vmem:[#allocation5 + $0x74] sm:$0xf]
        %v785 = vld [vmem:[#allocation5 + $0x78] sm:$0xff]
        %v786 = vld [vmem:[#allocation5 + $0x80] sm:$0xff]
        %v787 = vld [vmem:[#allocation5 + $0x88] sm:$0xf]
        %v788 = vld [vmem:[#allocation5 + $0x8c] sm:$0xff]
        %v789 = vld [vmem:[#allocation5 + $0x94] sm:$0xff]
        %v790 = vld [vmem:[#allocation5 + $0x9c] sm:$0xf]
        %v791 = vld [vmem:[#allocation5 + $0xa0] sm:$0xff]
        %v792 = vld [vmem:[#allocation5 + $0xa8] sm:$0xff]
        %v793 = vld [vmem:[#allocation5 + $0xb0] sm:$0xf]
        %v794 = vld [vmem:[#allocation5 + $0xb4] sm:$0xff]
        %v795 = vld [vmem:[#allocation5 + $0xbc] sm:$0xff]
        %v796 = vld [vmem:[#allocation5 + $0xc4] sm:$0xf]
        %v797 = vld [vmem:[#allocation5 + $0xc8] sm:$0xff]
        %v798 = vld [vmem:[#allocation5 + $0xd0] sm:$0xff]
        %v799 = vld [vmem:[#allocation5 + $0xd8] sm:$0xf]
        %v800 = vld [vmem:[#allocation5 + $0xdc] sm:$0xff]
        %v801 = vld [vmem:[#allocation5 + $0xe4] sm:$0xff]
        %v802 = vld [vmem:[#allocation5 + $0xec] sm:$0xf]
        %v803 = vld [vmem:[#allocation5 + $0xf0] sm:$0xff]
        %v804 = vld [vmem:[#allocation5 + $0xf8] sm:$0xff]
        %v805 = vld [vmem:[#allocation5 + $0x100] sm:$0xf]
        %v806 = vld [vmem:[#allocation5 + $0x104] sm:$0xff]
        %v807 = vld [vmem:[#allocation5 + $0x10c] sm:$0xff]
        %v808 = vld [vmem:[#allocation5 + $0x114] sm:$0xf]
        %v809 = vld [vmem:[#allocation5 + $0x118] sm:$0xff]
        %v810 = vld [vmem:[#allocation5 + $0x120] sm:$0xff]
        %v811 = vld [vmem:[#allocation5 + $0x128] sm:$0xf]
        %v812 = vld [vmem:[#allocation5 + $0x12c] sm:$0xff]
        %v813 = vld [vmem:[#allocation5 + $0x134] sm:$0xff]
        %v814 = vld [vmem:[#allocation5 + $0x13c] sm:$0xf]
        %v815 = vld [vmem:[#allocation5 + $0x140] sm:$0xff]
        %v816 = vld [vmem:[#allocation5 + $0x148] sm:$0xff]
        %v817 = vld [vmem:[#allocation5 + $0x150] sm:$0xf]
        %v818 = vld [vmem:[#allocation5 + $0x154] sm:$0xff]
        %v819 = vld [vmem:[#allocation5 + $0x15c] sm:$0xff]
        %v820 = vld [vmem:[#allocation5 + $0x164] sm:$0xf]
        %v821 = vld [vmem:[#allocation5 + $0x168] sm:$0xff]
        %v822 = vld [vmem:[#allocation5 + $0x170] sm:$0xff]
        %v823 = vld [vmem:[#allocation5 + $0x178] sm:$0xf]
        %v824 = vld [vmem:[#allocation5 + $0x17c] sm:$0xff]
        %v825 = vld [vmem:[#allocation5 + $0x184] sm:$0xff]
        %v826 = vld [vmem:[#allocation5 + $0x18c] sm:$0xf]
        %v827 = vld [vmem:[#allocation5 + $0x190] sm:$0xff]
        %v828 = vld [vmem:[#allocation5 + $0x198] sm:$0xff]
        %v829 = vld [vmem:[#allocation5 + $0x1a0] sm:$0xf]
        %v830 = vld [vmem:[#allocation5 + $0x1a4] sm:$0xff]
        %v831 = vld [vmem:[#allocation5 + $0x1ac] sm:$0xff]
        %v832 = vld [vmem:[#allocation5 + $0x1b4] sm:$0xf]
        %v833 = vld [vmem:[#allocation5 + $0x1b8] sm:$0xff]
        %v834 = vld [vmem:[#allocation5 + $0x1c0] sm:$0xff]
        %v835 = vld [vmem:[#allocation5 + $0x1c8] sm:$0xf]
        %v836 = vld [vmem:[#allocation5 + $0x1cc] sm:$0xff]
        %v837 = vld [vmem:[#allocation5 + $0x1d4] sm:$0xff]
        %v838 = vld [vmem:[#allocation5 + $0x1dc] sm:$0xf]
        %v839 = vld [vmem:[#allocation5 + $0x1e0] sm:$0xff]
        %v840 = vld [vmem:[#allocation5 + $0x1e8] sm:$0xff]
        %v841 = vld [vmem:[#allocation5 + $0x1f0] sm:$0xf]
        %v842 = vld [vmem:[#allocation5 + $0x1f4] sm:$0xff]
        %v843 = vld [vmem:[#allocation5 + $0x1fc] sm:$0xff]
        %v844 = vld [vmem:[#allocation5 + $0x204] sm:$0xf]
        %v845 = vld [vmem:[#allocation5 + $0x208] sm:$0xff]
        %v846 = vld [vmem:[#allocation5 + $0x210] sm:$0xff]
        %v847 = vld [vmem:[#allocation5 + $0x218] sm:$0xf]
        %v848 = vld [vmem:[#allocation5 + $0x21c] sm:$0xff]
        %v849 = vld [vmem:[#allocation5 + $0x224] sm:$0xff]
        %v850 = vld [vmem:[#allocation5 + $0x22c] sm:$0xf]
        %v851 = vld [vmem:[#allocation5 + $0x230] sm:$0xff]
        %v852 = vld [vmem:[#allocation5 + $0x238] sm:$0xff]
        %v853 = vld [vmem:[#allocation5 + $0x240] sm:$0xf]
        %v854 = vld [vmem:[#allocation5 + $0x244] sm:$0xff]
        %v855 = vld [vmem:[#allocation5 + $0x24c] sm:$0xff]
        %v856 = vld [vmem:[#allocation5 + $0x254] sm:$0xf]
        %v857 = vld [vmem:[#allocation5 + $0x258] sm:$0xff]
        %v858 = vld [vmem:[#allocation5 + $0x260] sm:$0xff]
        %v859 = vld [vmem:[#allocation5 + $0x268] sm:$0xf]
        %v860 = vld [vmem:[#allocation5 + $0x26c] sm:$0xff]
        %v861 = vld [vmem:[#allocation5 + $0x274] sm:$0xff]
        %v862 = vld [vmem:[#allocation5 + $0x27c] sm:$0xf]
        %v863 = vld [vmem:[#allocation5 + $0x280] sm:$0xff]
        %v864 = vld [vmem:[#allocation5 + $0x288] sm:$0xff]
        %v865 = vld [vmem:[#allocation5 + $0x290] sm:$0xf]
        %v866 = vld [vmem:[#allocation5 + $0x294] sm:$0xff]
        %v867 = vld [vmem:[#allocation5 + $0x29c] sm:$0xff]
        %v868 = vld [vmem:[#allocation5 + $0x2a4] sm:$0xf]
        %v869 = vld [vmem:[#allocation5 + $0x2a8] sm:$0xff]
        %v870 = vld [vmem:[#allocation5 + $0x2b0] sm:$0xff]
        %v871 = vld [vmem:[#allocation5 + $0x2b8] sm:$0xf]
        %v872 = vld [vmem:[#allocation5 + $0x2bc] sm:$0xff]
        %v873 = vld [vmem:[#allocation5 + $0x2c4] sm:$0xff]
        %v874 = vld [vmem:[#allocation5 + $0x2cc] sm:$0xf]
        %v875 = vld [vmem:[#allocation5 + $0x2d0] sm:$0xff]
        %v876 = vld [vmem:[#allocation5 + $0x2d8] sm:$0xff]
        %v877 = vld [vmem:[#allocation5 + $0x2e0] sm:$0xf]
        %v878 = vld [vmem:[#allocation5 + $0x2e4] sm:$0xff]
        %v879 = vld [vmem:[#allocation5 + $0x2ec] sm:$0xff]
        %v880 = vld [vmem:[#allocation5 + $0x2f4] sm:$0xf]
        %v881 = vld [vmem:[#allocation5 + $0x2f8] sm:$0xff]
        %v882 = vld [vmem:[#allocation5 + $0x300] sm:$0xff]
        %v883 = vld [vmem:[#allocation5 + $0x308] sm:$0xf]
        %v884 = vld [vmem:[#allocation5 + $0x30c] sm:$0xff]
        %v885 = vld [vmem:[#allocation5 + $0x314] sm:$0xff]
        %v886 = vld [vmem:[#allocation5 + $0x31c] sm:$0xf]
        %v887 = vld [vmem:[#allocation5 + $0x320] sm:$0xff]
        %v888 = vld [vmem:[#allocation5 + $0x328] sm:$0xff]
        %v889 = vld [vmem:[#allocation5 + $0x330] sm:$0xf]
        %v890 = vld [vmem:[#allocation5 + $0x334] sm:$0xff]
        %v891 = vld [vmem:[#allocation5 + $0x33c] sm:$0xff]
        %v892 = vld [vmem:[#allocation5 + $0x344] sm:$0xf]
        %v893 = vld [vmem:[#allocation5 + $0x348] sm:$0xff]
        %v894 = vld [vmem:[#allocation5 + $0x350] sm:$0xff]
        %v895 = vld [vmem:[#allocation5 + $0x358] sm:$0xf]
        %v896 = vld [vmem:[#allocation5 + $0x35c] sm:$0xff]
        %v897 = vld [vmem:[#allocation5 + $0x364] sm:$0xff]
        %v898 = vld [vmem:[#allocation5 + $0x36c] sm:$0xf]
        %v899 = vld [vmem:[#allocation5 + $0x370] sm:$0xff]
        %v900 = vld [vmem:[#allocation5 + $0x378] sm:$0xff]
        %v901 = vld [vmem:[#allocation5 + $0x380] sm:$0xf]
        %v902 = vld [vmem:[#allocation5 + $0x384] sm:$0xff]
        %v903 = vld [vmem:[#allocation5 + $0x38c] sm:$0xff]
        %v904 = vld [vmem:[#allocation5 + $0x394] sm:$0xf]
        %v905 = vld [vmem:[#allocation5 + $0x398] sm:$0xff]
        %v906 = vld [vmem:[#allocation5 + $0x3a0] sm:$0xff]
        %v907 = vld [vmem:[#allocation5 + $0x3a8] sm:$0xf]
        %v908 = vld [vmem:[#allocation5 + $0x3ac] sm:$0xff]
        %v909 = vld [vmem:[#allocation5 + $0x3b4] sm:$0xff]
        %v910 = vld [vmem:[#allocation5 + $0x3bc] sm:$0xf]
        %v911 = vld [vmem:[#allocation5 + $0x3c0] sm:$0xff]
        %v912 = vld [vmem:[#allocation5 + $0x3c8] sm:$0xff]
        %v913 = vld [vmem:[#allocation5 + $0x3d0] sm:$0xf]
        %v914 = vld [vmem:[#allocation5 + $0x3d4] sm:$0xff]
        %v915 = vld [vmem:[#allocation5 + $0x3dc] sm:$0xff]
        %v916 = vld [vmem:[#allocation5 + $0x3e4] sm:$0xf]
        %v917 = vld [vmem:[#allocation5 + $0x3e8] sm:$0xff]
        %v918 = vld [vmem:[#allocation5 + $0x3f0] sm:$0xff]
        %v919 = vld [vmem:[#allocation5 + $0x3f8] sm:$0xf]
        %v920 = vld [vmem:[#allocation5 + $0x3fc] sm:$0xff]
        %v921 = vld [vmem:[#allocation5 + $0x404] sm:$0xff]
        %v922 = vld [vmem:[#allocation5 + $0x40c] sm:$0xf]
        %v923 = vld [vmem:[#allocation5 + $0x410] sm:$0xff]
        %v924 = vld [vmem:[#allocation5 + $0x418] sm:$0xff]
        %v925 = vld [vmem:[#allocation5 + $0x420] sm:$0xf]
        %v926 = vld [vmem:[#allocation5 + $0x424] sm:$0xff]
        %v927 = vld [vmem:[#allocation5 + $0x42c] sm:$0xff]
        %v928 = vld [vmem:[#allocation5 + $0x434] sm:$0xf]
        %v929 = vld [vmem:[#allocation5 + $0x438] sm:$0xff]
        %v930 = vld [vmem:[#allocation5 + $0x440] sm:$0xff]
        %v931 = vld [vmem:[#allocation5 + $0x448] sm:$0xf]
        %v932 = vld [vmem:[#allocation5 + $0x44c] sm:$0xff]
        %v933 = vld [vmem:[#allocation5 + $0x454] sm:$0xff]
        %v934 = vld [vmem:[#allocation5 + $0x45c] sm:$0xf]
        %v935 = vld [vmem:[#allocation5 + $0x460] sm:$0xff]
        %v936 = vld [vmem:[#allocation5 + $0x468] sm:$0xff]
        %v937 = vld [vmem:[#allocation5 + $0x470] sm:$0xf]
        %v938 = vld [vmem:[#allocation5 + $0x474] sm:$0xff]
        %v939 = vld [vmem:[#allocation5 + $0x47c] sm:$0xff]
        %v940 = vld [vmem:[#allocation5 + $0x484] sm:$0xf]
        %v941 = vld [vmem:[#allocation5 + $0x488] sm:$0xff]
        %v942 = vld [vmem:[#allocation5 + $0x490] sm:$0xff]
        %v943 = vld [vmem:[#allocation5 + $0x498] sm:$0xf]
        %v944 = vld [vmem:[#allocation5 + $0x49c] sm:$0xff]
        %v945 = vld [vmem:[#allocation5 + $0x4a4] sm:$0xff]
        %v946 = vld [vmem:[#allocation5 + $0x4ac] sm:$0xf]
        %v947 = vld [vmem:[#allocation5 + $0x4b0] sm:$0xff]
        %v948 = vld [vmem:[#allocation5 + $0x4b8] sm:$0xff]
        %v949 = vld [vmem:[#allocation5 + $0x4c0] sm:$0xf]
        %v950 = vld [vmem:[#allocation5 + $0x4c4] sm:$0xff]
        %v951 = vld [vmem:[#allocation5 + $0x4cc] sm:$0xff]
        %v952 = vld [vmem:[#allocation5 + $0x4d4] sm:$0xf]
        %v953 = vld [vmem:[#allocation5 + $0x4d8] sm:$0xff]
        %v954 = vld [vmem:[#allocation5 + $0x4e0] sm:$0xff]
        %v955 = vld [vmem:[#allocation5 + $0x4e8] sm:$0xf]
        %v956 = vld [vmem:[#allocation5 + $0x4ec] sm:$0xff]
        %v957 = vld [vmem:[#allocation5 + $0x4f4] sm:$0xff]
        %v958 = vld [vmem:[#allocation5 + $0x4fc] sm:$0xf]
        %v959 = vld [vmem:[#allocation5 + $0x500] sm:$0xff]
        %v960 = vld [vmem:[#allocation5 + $0x508] sm:$0xff]
        %v961 = vld [vmem:[#allocation5 + $0x510] sm:$0xf]
        %v962 = vld [vmem:[#allocation5 + $0x514] sm:$0xff]
        %v963 = vld [vmem:[#allocation5 + $0x51c] sm:$0xff]
        %v964 = vld [vmem:[#allocation5 + $0x524] sm:$0xf]
        %v965 = vld [vmem:[#allocation5 + $0x528] sm:$0xff]
        %v966 = vld [vmem:[#allocation5 + $0x530] sm:$0xff]
        %v967 = vld [vmem:[#allocation5 + $0x538] sm:$0xf]
        %v968 = vld [vmem:[#allocation5 + $0x53c] sm:$0xff]
        %v969 = vld [vmem:[#allocation5 + $0x544] sm:$0xff]
        %v970 = vld [vmem:[#allocation5 + $0x54c] sm:$0xf]
        %v971 = vld [vmem:[#allocation5 + $0x550] sm:$0xff]
        %v972 = vld [vmem:[#allocation5 + $0x558] sm:$0xff]
        %v973 = vld [vmem:[#allocation5 + $0x560] sm:$0xf]
        %v974 = vld [vmem:[#allocation5 + $0x564] sm:$0xff]
        %v975 = vld [vmem:[#allocation5 + $0x56c] sm:$0xff]
        %v976 = vld [vmem:[#allocation5 + $0x574] sm:$0xf]
        %v977 = vld [vmem:[#allocation5 + $0x578] sm:$0xff]
        %v978 = vld [vmem:[#allocation5 + $0x580] sm:$0xff]
        %v979 = vld [vmem:[#allocation5 + $0x588] sm:$0xf]
        %v980 = vld [vmem:[#allocation5 + $0x58c] sm:$0xff]
        %v981 = vld [vmem:[#allocation5 + $0x594] sm:$0xff]
        %v982 = vld [vmem:[#allocation5 + $0x59c] sm:$0xf]
        %v983 = vld [vmem:[#allocation5 + $0x5a0] sm:$0xff]
        %v984 = vld [vmem:[#allocation5 + $0x5a8] sm:$0xff]
        %v985 = vld [vmem:[#allocation5 + $0x5b0] sm:$0xf]
        %v986 = vld [vmem:[#allocation5 + $0x5b4] sm:$0xff]
        %v987 = vld [vmem:[#allocation5 + $0x5bc] sm:$0xff]
        %v988 = vld [vmem:[#allocation5 + $0x5c4] sm:$0xf]
        %v989 = vld [vmem:[#allocation5 + $0x5c8] sm:$0xff]
        %v990 = vld [vmem:[#allocation5 + $0x5d0] sm:$0xff]
        %v991 = vld [vmem:[#allocation5 + $0x5d8] sm:$0xf]
        %v992 = vld [vmem:[#allocation5 + $0x5dc] sm:$0xff]
        %v993 = vld [vmem:[#allocation5 + $0x5e4] sm:$0xff]
        %v994 = vld [vmem:[#allocation5 + $0x5ec] sm:$0xf]
        %v995 = vld [vmem:[#allocation5 + $0x5f0] sm:$0xff]
        %v996 = vld [vmem:[#allocation5 + $0x5f8] sm:$0xff]
        %v997 = vld [vmem:[#allocation5 + $0x600] sm:$0xf]
        %v998 = vld [vmem:[#allocation5 + $0x604] sm:$0xff]
        %v999 = vld [vmem:[#allocation5 + $0x60c] sm:$0xff]
        %v1000 = vld [vmem:[#allocation5 + $0x614] sm:$0xf]
        %v1001 = vld [vmem:[#allocation5 + $0x618] sm:$0xff]
        %v1002 = vld [vmem:[#allocation5 + $0x620] sm:$0xff]
        %v1003 = vld [vmem:[#allocation5 + $0x628] sm:$0xf]
        %v1004 = vld [vmem:[#allocation5 + $0x62c] sm:$0xff]
        %v1005 = vld [vmem:[#allocation5 + $0x634] sm:$0xff]
        %v1006 = vld [vmem:[#allocation5 + $0x63c] sm:$0xf]
        %v1007 = vld [vmem:[#allocation5 + $0x640] sm:$0xff]
        %v1008 = vld [vmem:[#allocation5 + $0x648] sm:$0xff]
        %v1009 = vld [vmem:[#allocation5 + $0x650] sm:$0xf]
        %v1010 = vld [vmem:[#allocation5 + $0x654] sm:$0xff]
        %v1011 = vld [vmem:[#allocation5 + $0x65c] sm:$0xff]
        %v1012 = vld [vmem:[#allocation5 + $0x664] sm:$0xf]
        %v1013 = vld [vmem:[#allocation5 + $0x668] sm:$0xff]
        %v1014 = vld [vmem:[#allocation5 + $0x670] sm:$0xff]
        %v1015 = vld [vmem:[#allocation5 + $0x678] sm:$0xf]
        %v1016 = vld [vmem:[#allocation5 + $0x67c] sm:$0xff]
        %v1017 = vld [vmem:[#allocation5 + $0x684] sm:$0xff]
        %v1018 = vld [vmem:[#allocation5 + $0x68c] sm:$0xf]
        %v1019 = vld [vmem:[#allocation5 + $0x690] sm:$0xff]
        %v1020 = vld [vmem:[#allocation5 + $0x698] sm:$0xff]
        %v1021 = vld [vmem:[#allocation5 + $0x6a0] sm:$0xf]
        %v1022 = vld [vmem:[#allocation5 + $0x6a4] sm:$0xff]
        %v1023 = vld [vmem:[#allocation5 + $0x6ac] sm:$0xff]
        %v1024 = vld [vmem:[#allocation5 + $0x6b4] sm:$0xf]
        %v1025 = vld [vmem:[#allocation5 + $0x6b8] sm:$0xff]
        %v1026 = vld [vmem:[#allocation5 + $0x6c0] sm:$0xff]
        %v1027 = vld [vmem:[#allocation5 + $0x6c8] sm:$0xf]
        %v1028 = vld [vmem:[#allocation5 + $0x6cc] sm:$0xff]
        %v1029 = vld [vmem:[#allocation5 + $0x6d4] sm:$0xff]
        %v1030 = vld [vmem:[#allocation5 + $0x6dc] sm:$0xf]
        %v1031 = vld [vmem:[#allocation5 + $0x6e0] sm:$0xff]
        %v1032 = vld [vmem:[#allocation5 + $0x6e8] sm:$0xff]
        %v1033 = vld [vmem:[#allocation5 + $0x6f0] sm:$0xf]
        %v1034 = vld [vmem:[#allocation5 + $0x6f4] sm:$0xff]
        %v1035 = vld [vmem:[#allocation5 + $0x6fc] sm:$0xff]
        %v1036 = vld [vmem:[#allocation5 + $0x704] sm:$0xf]
        %v1037 = vld [vmem:[#allocation5 + $0x708] sm:$0xff]
        %v1038 = vld [vmem:[#allocation5 + $0x710] sm:$0xff]
        %v1039 = vld [vmem:[#allocation5 + $0x718] sm:$0xf]
        %v1040 = vld [vmem:[#allocation5 + $0x71c] sm:$0xff]
        %v1041 = vld [vmem:[#allocation5 + $0x724] sm:$0xff]
        %v1042 = vld [vmem:[#allocation5 + $0x72c] sm:$0xf]
        %v1043 = vld [vmem:[#allocation5 + $0x730] sm:$0xff]
        %v1044 = vld [vmem:[#allocation5 + $0x738] sm:$0xff]
        %v1045 = vld [vmem:[#allocation5 + $0x740] sm:$0xf]
        %v1046 = vld [vmem:[#allocation5 + $0x744] sm:$0xff]
        %v1047 = vld [vmem:[#allocation5 + $0x74c] sm:$0xff]
        %v1048 = vld [vmem:[#allocation5 + $0x754] sm:$0xf]
        %v1049 = vld [vmem:[#allocation5 + $0x758] sm:$0xff]
        %v1050 = vld [vmem:[#allocation5 + $0x760] sm:$0xff]
        %v1051 = vld [vmem:[#allocation5 + $0x768] sm:$0xf]
        %v1052 = vld [vmem:[#allocation5 + $0x76c] sm:$0xff]
        %v1053 = vld [vmem:[#allocation5 + $0x774] sm:$0xff]
        %v1054 = vld [vmem:[#allocation5 + $0x77c] sm:$0xf]
        %v1055 = vld [vmem:[%s3] sm:$0x1f]
        %v1057 = vperm.slane %v1055, 0
        %v1058 = vperm.slane %v1055, 1
        %v1059 = vperm.slane %v1055, 2
        %v1060 = vperm.slane %v1055, 3
        %v1061 = vperm.slane %v1055, 4
        %v1115 = vunpack.c.l.b16 %v719
        %v1116 = vunpack.c.l.b16 %v720
        %v1117 = vunpack.c.l.b16 %v721
        %v1118 = vunpack.c.l.b16 %v722
        %v1119 = vunpack.c.l.b16 %v723
        %v1120 = vunpack.c.l.b16 %v724
        %v1121 = vunpack.c.l.b16 %v725
        %v1122 = vunpack.c.l.b16 %v726
        %v1123 = vunpack.c.l.b16 %v727
        %v1124 = vunpack.c.l.b16 %v728
        %v1125 = vunpack.c.l.b16 %v729
        %v1126 = vunpack.c.l.b16 %v730
        %v1127 = vunpack.c.l.b16 %v731
        %v1128 = vunpack.c.l.b16 %v732
        %v1129 = vunpack.c.l.b16 %v733
        %v1130 = vunpack.c.l.b16 %v734
        %v1131 = vunpack.c.l.b16 %v735
        %v1132 = vunpack.c.l.b16 %v736
        %v1133 = vunpack.c.l.b16 %v737
        %v1134 = vunpack.c.l.b16 %v738
        %v1135 = vunpack.c.l.b16 %v739
        %v1136 = vunpack.c.l.b16 %v740
        %v1137 = vunpack.c.l.b16 %v741
        %v1138 = vunpack.c.l.b16 %v742
        %v1139 = vunpack.c.l.b16 %v743
        %v1140 = vunpack.c.l.b16 %v744
        %v1141 = vunpack.c.l.b16 %v745
        %v1142 = vunpack.c.l.b16 %v746
        %v1143 = vunpack.c.l.b16 %v747
        %v1144 = vunpack.c.l.b16 %v748
        %v1145 = vunpack.c.l.b16 %v749
        %v1146 = vunpack.c.l.b16 %v750
        %v1147 = vunpack.c.l.b16 %v751
        %v1148 = vunpack.c.l.b16 %v752
        %v1149 = vunpack.c.l.b16 %v753
        %v1150 = vunpack.c.l.b16 %v754
        %v1151 = vunpack.c.l.b16 %v755
        %v1152 = vunpack.c.l.b16 %v756
        %v1153 = vunpack.c.l.b16 %v757
        %v1154 = vunpack.c.l.b16 %v758
        %v1155 = vunpack.c.l.b16 %v759
        %v1156 = vunpack.c.l.b16 %v760
        %v1157 = vunpack.c.l.b16 %v761
        %v1158 = vunpack.c.l.b16 %v762
        %v1159 = vunpack.c.l.b16 %v763
        %v1160 = vunpack.c.l.b16 %v764
        %v1161 = vunpack.c.l.b16 %v765
        %v1162 = vunpack.c.l.b16 %v766
        %vm1163 = vcmask 1041409
        %v1164 = vsel %vm1163, %v1121, %v1115
        %vm1165 = vcmask 1042434
        %v1166 = vsel %vm1165, %v1127, %v1164
        %vm1167 = vcmask 1043459
        %v1168 = vsel %vm1167, %v1133, %v1166
        %vm1169 = vcmask 1044484
        %v1170 = vsel %vm1169, %v1139, %v1168
        %vm1171 = vcmask 1045509
        %v1172 = vsel %vm1171, %v1145, %v1170
        %vm1173 = vcmask 1046534
        %v1174 = vsel %vm1173, %v1151, %v1172
        %vm1175 = vcmask 1047559
        %v1176 = vsel %vm1175, %v1157, %v1174
        %v1177 = vsel %vm1163, %v1122, %v1116
        %v1178 = vsel %vm1165, %v1128, %v1177
        %v1179 = vsel %vm1167, %v1134, %v1178
        %v1180 = vsel %vm1169, %v1140, %v1179
        %v1181 = vsel %vm1171, %v1146, %v1180
        %v1182 = vsel %vm1173, %v1152, %v1181
        %v1183 = vsel %vm1175, %v1158, %v1182
        %v1184 = vsel %vm1163, %v1123, %v1117
        %v1185 = vsel %vm1165, %v1129, %v1184
        %v1186 = vsel %vm1167, %v1135, %v1185
        %v1187 = vsel %vm1169, %v1141, %v1186
        %v1188 = vsel %vm1171, %v1147, %v1187
        %v1189 = vsel %vm1173, %v1153, %v1188
        %v1190 = vsel %vm1175, %v1159, %v1189
        %v1191 = vsel %vm1163, %v1124, %v1118
        %v1192 = vsel %vm1165, %v1130, %v1191
        %v1193 = vsel %vm1167, %v1136, %v1192
        %v1194 = vsel %vm1169, %v1142, %v1193
        %v1195 = vsel %vm1171, %v1148, %v1194
        %v1196 = vsel %vm1173, %v1154, %v1195
        %v1197 = vsel %vm1175, %v1160, %v1196
        %v1198 = vsel %vm1163, %v1125, %v1119
        %v1199 = vsel %vm1165, %v1131, %v1198
        %v1200 = vsel %vm1167, %v1137, %v1199
        %v1201 = vsel %vm1169, %v1143, %v1200
        %v1202 = vsel %vm1171, %v1149, %v1201
        %v1203 = vsel %vm1173, %v1155, %v1202
        %v1204 = vsel %vm1175, %v1161, %v1203
        %v1205 = vsel %vm1163, %v1126, %v1120
        %v1206 = vsel %vm1165, %v1132, %v1205
        %v1207 = vsel %vm1167, %v1138, %v1206
        %v1208 = vsel %vm1169, %v1144, %v1207
        %v1209 = vsel %vm1171, %v1150, %v1208
        %v1210 = vsel %vm1173, %v1156, %v1209
        %v1211 = vsel %vm1175, %v1162, %v1210
        %v1212 = vpack.c.b16 %v1176, %v1176
        %v1213 = vpack.c.b16 %v1183, %v1183
        %v1214 = vpack.c.b16 %v1190, %v1190
        %v1215 = vpack.c.b16 %v1197, %v1197
        %v1216 = vpack.c.b16 %v1204, %v1204
        %v1217 = vpack.c.b16 %v1211, %v1211
        %v1512 = vunpack.c.l.b16 %v767
        %v1513 = vunpack.c.h.b16 %v767
        %v1514 = vunpack.c.l.b16 %v768
        %v1515 = vunpack.c.h.b16 %v768
        %v1516 = vunpack.c.l.b16 %v769
        %v1517 = vunpack.c.l.b16 %v770
        %v1518 = vunpack.c.h.b16 %v770
        %v1519 = vunpack.c.l.b16 %v771
        %v1520 = vunpack.c.h.b16 %v771
        %v1521 = vunpack.c.l.b16 %v772
        %v1522 = vunpack.c.l.b16 %v773
        %v1523 = vunpack.c.h.b16 %v773
        %v1524 = vunpack.c.l.b16 %v774
        %v1525 = vunpack.c.h.b16 %v774
        %v1526 = vunpack.c.l.b16 %v775
        %v1527 = vunpack.c.l.b16 %v776
        %v1528 = vunpack.c.h.b16 %v776
        %v1529 = vunpack.c.l.b16 %v777
        %v1530 = vunpack.c.h.b16 %v777
        %v1531 = vunpack.c.l.b16 %v778
        %v1532 = vunpack.c.l.b16 %v779
        %v1533 = vunpack.c.h.b16 %v779
        %v1534 = vunpack.c.l.b16 %v780
        %v1535 = vunpack.c.h.b16 %v780
        %v1536 = vunpack.c.l.b16 %v781
        %v1537 = vunpack.c.l.b16 %v782
        %v1538 = vunpack.c.h.b16 %v782
        %v1539 = vunpack.c.l.b16 %v783
        %v1540 = vunpack.c.h.b16 %v783
        %v1541 = vunpack.c.l.b16 %v784
        %v1542 = vunpack.c.l.b16 %v785
        %v1543 = vunpack.c.h.b16 %v785
        %v1544 = vunpack.c.l.b16 %v786
        %v1545 = vunpack.c.h.b16 %v786
        %v1546 = vunpack.c.l.b16 %v787
        %v1547 = vunpack.c.l.b16 %v788
        %v1548 = vunpack.c.h.b16 %v788
        %v1549 = vunpack.c.l.b16 %v789
        %v1550 = vunpack.c.h.b16 %v789
        %v1551 = vunpack.c.l.b16 %v790
        %v1552 = vunpack.c.l.b16 %v791
        %v1553 = vunpack.c.h.b16 %v791
        %v1554 = vunpack.c.l.b16 %v792
        %v1555 = vunpack.c.h.b16 %v792
        %v1556 = vunpack.c.l.b16 %v793
        %v1557 = vunpack.c.l.b16 %v794
        %v1558 = vunpack.c.h.b16 %v794
        %v1559 = vunpack.c.l.b16 %v795
        %v1560 = vunpack.c.h.b16 %v795
        %v1561 = vunpack.c.l.b16 %v796
        %v1562 = vunpack.c.l.b16 %v797
        %v1563 = vunpack.c.h.b16 %v797
        %v1564 = vunpack.c.l.b16 %v798
        %v1565 = vunpack.c.h.b16 %v798
        %v1566 = vunpack.c.l.b16 %v799
        %v1567 = vunpack.c.l.b16 %v800
        %v1568 = vunpack.c.h.b16 %v800
        %v1569 = vunpack.c.l.b16 %v801
        %v1570 = vunpack.c.h.b16 %v801
        %v1571 = vunpack.c.l.b16 %v802
        %v1572 = vunpack.c.l.b16 %v803
        %v1573 = vunpack.c.h.b16 %v803
        %v1574 = vunpack.c.l.b16 %v804
        %v1575 = vunpack.c.h.b16 %v804
        %v1576 = vunpack.c.l.b16 %v805
        %v1577 = vunpack.c.l.b16 %v806
        %v1578 = vunpack.c.h.b16 %v806
        %v1579 = vunpack.c.l.b16 %v807
        %v1580 = vunpack.c.h.b16 %v807
        %v1581 = vunpack.c.l.b16 %v808
        %v1582 = vunpack.c.l.b16 %v809
        %v1583 = vunpack.c.h.b16 %v809
        %v1584 = vunpack.c.l.b16 %v810
        %v1585 = vunpack.c.h.b16 %v810
        %v1586 = vunpack.c.l.b16 %v811
        %v1587 = vunpack.c.l.b16 %v812
        %v1588 = vunpack.c.h.b16 %v812
        %v1589 = vunpack.c.l.b16 %v813
        %v1590 = vunpack.c.h.b16 %v813
        %v1591 = vunpack.c.l.b16 %v814
        %v1592 = vunpack.c.l.b16 %v815
        %v1593 = vunpack.c.h.b16 %v815
        %v1594 = vunpack.c.l.b16 %v816
        %v1595 = vunpack.c.h.b16 %v816
        %v1596 = vunpack.c.l.b16 %v817
        %v1597 = vunpack.c.l.b16 %v818
        %v1598 = vunpack.c.h.b16 %v818
        %v1599 = vunpack.c.l.b16 %v819
        %v1600 = vunpack.c.h.b16 %v819
        %v1601 = vunpack.c.l.b16 %v820
        %v1602 = vunpack.c.l.b16 %v821
        %v1603 = vunpack.c.h.b16 %v821
        %v1604 = vunpack.c.l.b16 %v822
        %v1605 = vunpack.c.h.b16 %v822
        %v1606 = vunpack.c.l.b16 %v823
        %v1607 = vunpack.c.l.b16 %v824
        %v1608 = vunpack.c.h.b16 %v824
        %v1609 = vunpack.c.l.b16 %v825
        %v1610 = vunpack.c.h.b16 %v825
        %v1611 = vunpack.c.l.b16 %v826
        %v1612 = vunpack.c.l.b16 %v827
        %v1613 = vunpack.c.h.b16 %v827
        %v1614 = vunpack.c.l.b16 %v828
        %v1615 = vunpack.c.h.b16 %v828
        %v1616 = vunpack.c.l.b16 %v829
        %v1617 = vunpack.c.l.b16 %v830
        %v1618 = vunpack.c.h.b16 %v830
        %v1619 = vunpack.c.l.b16 %v831
        %v1620 = vunpack.c.h.b16 %v831
        %v1621 = vunpack.c.l.b16 %v832
        %v1622 = vunpack.c.l.b16 %v833
        %v1623 = vunpack.c.h.b16 %v833
        %v1624 = vunpack.c.l.b16 %v834
        %v1625 = vunpack.c.h.b16 %v834
        %v1626 = vunpack.c.l.b16 %v835
        %v1627 = vunpack.c.l.b16 %v836
        %v1628 = vunpack.c.h.b16 %v836
        %v1629 = vunpack.c.l.b16 %v837
        %v1630 = vunpack.c.h.b16 %v837
        %v1631 = vunpack.c.l.b16 %v838
        %v1632 = vunpack.c.l.b16 %v839
        %v1633 = vunpack.c.h.b16 %v839
        %v1634 = vunpack.c.l.b16 %v840
        %v1635 = vunpack.c.h.b16 %v840
        %v1636 = vunpack.c.l.b16 %v841
        %v1637 = vunpack.c.l.b16 %v842
        %v1638 = vunpack.c.h.b16 %v842
        %v1639 = vunpack.c.l.b16 %v843
        %v1640 = vunpack.c.h.b16 %v843
        %v1641 = vunpack.c.l.b16 %v844
        %v1642 = vunpack.c.l.b16 %v845
        %v1643 = vunpack.c.h.b16 %v845
        %v1644 = vunpack.c.l.b16 %v846
        %v1645 = vunpack.c.h.b16 %v846
        %v1646 = vunpack.c.l.b16 %v847
        %v1647 = vunpack.c.l.b16 %v848
        %v1648 = vunpack.c.h.b16 %v848
        %v1649 = vunpack.c.l.b16 %v849
        %v1650 = vunpack.c.h.b16 %v849
        %v1651 = vunpack.c.l.b16 %v850
        %v1652 = vunpack.c.l.b16 %v851
        %v1653 = vunpack.c.h.b16 %v851
        %v1654 = vunpack.c.l.b16 %v852
        %v1655 = vunpack.c.h.b16 %v852
        %v1656 = vunpack.c.l.b16 %v853
        %v1657 = vunpack.c.l.b16 %v854
        %v1658 = vunpack.c.h.b16 %v854
        %v1659 = vunpack.c.l.b16 %v855
        %v1660 = vunpack.c.h.b16 %v855
        %v1661 = vunpack.c.l.b16 %v856
        %v1662 = vunpack.c.l.b16 %v857
        %v1663 = vunpack.c.h.b16 %v857
        %v1664 = vunpack.c.l.b16 %v858
        %v1665 = vunpack.c.h.b16 %v858
        %v1666 = vunpack.c.l.b16 %v859
        %v1667 = vunpack.c.l.b16 %v860
        %v1668 = vunpack.c.h.b16 %v860
        %v1669 = vunpack.c.l.b16 %v861
        %v1670 = vunpack.c.h.b16 %v861
        %v1671 = vunpack.c.l.b16 %v862
        %v1672 = vunpack.c.l.b16 %v863
        %v1673 = vunpack.c.h.b16 %v863
        %v1674 = vunpack.c.l.b16 %v864
        %v1675 = vunpack.c.h.b16 %v864
        %v1676 = vunpack.c.l.b16 %v865
        %v1677 = vunpack.c.l.b16 %v866
        %v1678 = vunpack.c.h.b16 %v866
        %v1679 = vunpack.c.l.b16 %v867
        %v1680 = vunpack.c.h.b16 %v867
        %v1681 = vunpack.c.l.b16 %v868
        %v1682 = vunpack.c.l.b16 %v869
        %v1683 = vunpack.c.h.b16 %v869
        %v1684 = vunpack.c.l.b16 %v870
        %v1685 = vunpack.c.h.b16 %v870
        %v1686 = vunpack.c.l.b16 %v871
        %v1687 = vunpack.c.l.b16 %v872
        %v1688 = vunpack.c.h.b16 %v872
        %v1689 = vunpack.c.l.b16 %v873
        %v1690 = vunpack.c.h.b16 %v873
        %v1691 = vunpack.c.l.b16 %v874
        %v1692 = vunpack.c.l.b16 %v875
        %v1693 = vunpack.c.h.b16 %v875
        %v1694 = vunpack.c.l.b16 %v876
        %v1695 = vunpack.c.h.b16 %v876
        %v1696 = vunpack.c.l.b16 %v877
        %v1697 = vunpack.c.l.b16 %v878
        %v1698 = vunpack.c.h.b16 %v878
        %v1699 = vunpack.c.l.b16 %v879
        %v1700 = vunpack.c.h.b16 %v879
        %v1701 = vunpack.c.l.b16 %v880
        %v1702 = vunpack.c.l.b16 %v881
        %v1703 = vunpack.c.h.b16 %v881
        %v1704 = vunpack.c.l.b16 %v882
        %v1705 = vunpack.c.h.b16 %v882
        %v1706 = vunpack.c.l.b16 %v883
        %v1707 = vunpack.c.l.b16 %v884
        %v1708 = vunpack.c.h.b16 %v884
        %v1709 = vunpack.c.l.b16 %v885
        %v1710 = vunpack.c.h.b16 %v885
        %v1711 = vunpack.c.l.b16 %v886
        %v1712 = vunpack.c.l.b16 %v887
        %v1713 = vunpack.c.h.b16 %v887
        %v1714 = vunpack.c.l.b16 %v888
        %v1715 = vunpack.c.h.b16 %v888
        %v1716 = vunpack.c.l.b16 %v889
        %v1717 = vunpack.c.l.b16 %v890
        %v1718 = vunpack.c.h.b16 %v890
        %v1719 = vunpack.c.l.b16 %v891
        %v1720 = vunpack.c.h.b16 %v891
        %v1721 = vunpack.c.l.b16 %v892
        %v1722 = vunpack.c.l.b16 %v893
        %v1723 = vunpack.c.h.b16 %v893
        %v1724 = vunpack.c.l.b16 %v894
        %v1725 = vunpack.c.h.b16 %v894
        %v1726 = vunpack.c.l.b16 %v895
        %v1727 = vunpack.c.l.b16 %v896
        %v1728 = vunpack.c.h.b16 %v896
        %v1729 = vunpack.c.l.b16 %v897
        %v1730 = vunpack.c.h.b16 %v897
        %v1731 = vunpack.c.l.b16 %v898
        %v1732 = vunpack.c.l.b16 %v899
        %v1733 = vunpack.c.h.b16 %v899
        %v1734 = vunpack.c.l.b16 %v900
        %v1735 = vunpack.c.h.b16 %v900
        %v1736 = vunpack.c.l.b16 %v901
        %v1737 = vunpack.c.l.b16 %v902
        %v1738 = vunpack.c.h.b16 %v902
        %v1739 = vunpack.c.l.b16 %v903
        %v1740 = vunpack.c.h.b16 %v903
        %v1741 = vunpack.c.l.b16 %v904
        %v1742 = vunpack.c.l.b16 %v905
        %v1743 = vunpack.c.h.b16 %v905
        %v1744 = vunpack.c.l.b16 %v906
        %v1745 = vunpack.c.h.b16 %v906
        %v1746 = vunpack.c.l.b16 %v907
        %v1747 = vunpack.c.l.b16 %v908
        %v1748 = vunpack.c.h.b16 %v908
        %v1749 = vunpack.c.l.b16 %v909
        %v1750 = vunpack.c.h.b16 %v909
        %v1751 = vunpack.c.l.b16 %v910
        %v1752 = vunpack.c.l.b16 %v911
        %v1753 = vunpack.c.h.b16 %v911
        %v1754 = vunpack.c.l.b16 %v912
        %v1755 = vunpack.c.h.b16 %v912
        %v1756 = vunpack.c.l.b16 %v913
        %v1757 = vunpack.c.l.b16 %v914
        %v1758 = vunpack.c.h.b16 %v914
        %v1759 = vunpack.c.l.b16 %v915
        %v1760 = vunpack.c.h.b16 %v915
        %v1761 = vunpack.c.l.b16 %v916
        %v1762 = vunpack.c.l.b16 %v917
        %v1763 = vunpack.c.h.b16 %v917
        %v1764 = vunpack.c.l.b16 %v918
        %v1765 = vunpack.c.h.b16 %v918
        %v1766 = vunpack.c.l.b16 %v919
        %v1767 = vunpack.c.l.b16 %v920
        %v1768 = vunpack.c.h.b16 %v920
        %v1769 = vunpack.c.l.b16 %v921
        %v1770 = vunpack.c.h.b16 %v921
        %v1771 = vunpack.c.l.b16 %v922
        %v1772 = vunpack.c.l.b16 %v923
        %v1773 = vunpack.c.h.b16 %v923
        %v1774 = vunpack.c.l.b16 %v924
        %v1775 = vunpack.c.h.b16 %v924
        %v1776 = vunpack.c.l.b16 %v925
        %v1777 = vunpack.c.l.b16 %v926
        %v1778 = vunpack.c.h.b16 %v926
        %v1779 = vunpack.c.l.b16 %v927
        %v1780 = vunpack.c.h.b16 %v927
        %v1781 = vunpack.c.l.b16 %v928
        %v1782 = vunpack.c.l.b16 %v929
        %v1783 = vunpack.c.h.b16 %v929
        %v1784 = vunpack.c.l.b16 %v930
        %v1785 = vunpack.c.h.b16 %v930
        %v1786 = vunpack.c.l.b16 %v931
        %v1787 = vunpack.c.l.b16 %v932
        %v1788 = vunpack.c.h.b16 %v932
        %v1789 = vunpack.c.l.b16 %v933
        %v1790 = vunpack.c.h.b16 %v933
        %v1791 = vunpack.c.l.b16 %v934
        %v1792 = vunpack.c.l.b16 %v935
        %v1793 = vunpack.c.h.b16 %v935
        %v1794 = vunpack.c.l.b16 %v936
        %v1795 = vunpack.c.h.b16 %v936
        %v1796 = vunpack.c.l.b16 %v937
        %v1797 = vunpack.c.l.b16 %v938
        %v1798 = vunpack.c.h.b16 %v938
        %v1799 = vunpack.c.l.b16 %v939
        %v1800 = vunpack.c.h.b16 %v939
        %v1801 = vunpack.c.l.b16 %v940
        %v1802 = vunpack.c.l.b16 %v941
        %v1803 = vunpack.c.h.b16 %v941
        %v1804 = vunpack.c.l.b16 %v942
        %v1805 = vunpack.c.h.b16 %v942
        %v1806 = vunpack.c.l.b16 %v943
        %v1807 = vunpack.c.l.b16 %v944
        %v1808 = vunpack.c.h.b16 %v944
        %v1809 = vunpack.c.l.b16 %v945
        %v1810 = vunpack.c.h.b16 %v945
        %v1811 = vunpack.c.l.b16 %v946
        %v1812 = vunpack.c.l.b16 %v947
        %v1813 = vunpack.c.h.b16 %v947
        %v1814 = vunpack.c.l.b16 %v948
        %v1815 = vunpack.c.h.b16 %v948
        %v1816 = vunpack.c.l.b16 %v949
        %v1817 = vunpack.c.l.b16 %v950
        %v1818 = vunpack.c.h.b16 %v950
        %v1819 = vunpack.c.l.b16 %v951
        %v1820 = vunpack.c.h.b16 %v951
        %v1821 = vunpack.c.l.b16 %v952
        %v1822 = vunpack.c.l.b16 %v953
        %v1823 = vunpack.c.h.b16 %v953
        %v1824 = vunpack.c.l.b16 %v954
        %v1825 = vunpack.c.h.b16 %v954
        %v1826 = vunpack.c.l.b16 %v955
        %v1827 = vunpack.c.l.b16 %v956
        %v1828 = vunpack.c.h.b16 %v956
        %v1829 = vunpack.c.l.b16 %v957
        %v1830 = vunpack.c.h.b16 %v957
        %v1831 = vunpack.c.l.b16 %v958
        %v1832 = vunpack.c.l.b16 %v959
        %v1833 = vunpack.c.h.b16 %v959
        %v1834 = vunpack.c.l.b16 %v960
        %v1835 = vunpack.c.h.b16 %v960
        %v1836 = vunpack.c.l.b16 %v961
        %v1837 = vunpack.c.l.b16 %v962
        %v1838 = vunpack.c.h.b16 %v962
        %v1839 = vunpack.c.l.b16 %v963
        %v1840 = vunpack.c.h.b16 %v963
        %v1841 = vunpack.c.l.b16 %v964
        %v1842 = vunpack.c.l.b16 %v965
        %v1843 = vunpack.c.h.b16 %v965
        %v1844 = vunpack.c.l.b16 %v966
        %v1845 = vunpack.c.h.b16 %v966
        %v1846 = vunpack.c.l.b16 %v967
        %v1847 = vunpack.c.l.b16 %v968
        %v1848 = vunpack.c.h.b16 %v968
        %v1849 = vunpack.c.l.b16 %v969
        %v1850 = vunpack.c.h.b16 %v969
        %v1851 = vunpack.c.l.b16 %v970
        %v1852 = vunpack.c.l.b16 %v971
        %v1853 = vunpack.c.h.b16 %v971
        %v1854 = vunpack.c.l.b16 %v972
        %v1855 = vunpack.c.h.b16 %v972
        %v1856 = vunpack.c.l.b16 %v973
        %v1857 = vunpack.c.l.b16 %v974
        %v1858 = vunpack.c.h.b16 %v974
        %v1859 = vunpack.c.l.b16 %v975
        %v1860 = vunpack.c.h.b16 %v975
        %v1861 = vunpack.c.l.b16 %v976
        %v1862 = vunpack.c.l.b16 %v977
        %v1863 = vunpack.c.h.b16 %v977
        %v1864 = vunpack.c.l.b16 %v978
        %v1865 = vunpack.c.h.b16 %v978
        %v1866 = vunpack.c.l.b16 %v979
        %v1867 = vunpack.c.l.b16 %v980
        %v1868 = vunpack.c.h.b16 %v980
        %v1869 = vunpack.c.l.b16 %v981
        %v1870 = vunpack.c.h.b16 %v981
        %v1871 = vunpack.c.l.b16 %v982
        %v1872 = vunpack.c.l.b16 %v983
        %v1873 = vunpack.c.h.b16 %v983
        %v1874 = vunpack.c.l.b16 %v984
        %v1875 = vunpack.c.h.b16 %v984
        %v1876 = vunpack.c.l.b16 %v985
        %v1877 = vunpack.c.l.b16 %v986
        %v1878 = vunpack.c.h.b16 %v986
        %v1879 = vunpack.c.l.b16 %v987
        %v1880 = vunpack.c.h.b16 %v987
        %v1881 = vunpack.c.l.b16 %v988
        %v1882 = vunpack.c.l.b16 %v989
        %v1883 = vunpack.c.h.b16 %v989
        %v1884 = vunpack.c.l.b16 %v990
        %v1885 = vunpack.c.h.b16 %v990
        %v1886 = vunpack.c.l.b16 %v991
        %v1887 = vunpack.c.l.b16 %v992
        %v1888 = vunpack.c.h.b16 %v992
        %v1889 = vunpack.c.l.b16 %v993
        %v1890 = vunpack.c.h.b16 %v993
        %v1891 = vunpack.c.l.b16 %v994
        %v1892 = vunpack.c.l.b16 %v995
        %v1893 = vunpack.c.h.b16 %v995
        %v1894 = vunpack.c.l.b16 %v996
        %v1895 = vunpack.c.h.b16 %v996
        %v1896 = vunpack.c.l.b16 %v997
        %v1897 = vunpack.c.l.b16 %v998
        %v1898 = vunpack.c.h.b16 %v998
        %v1899 = vunpack.c.l.b16 %v999
        %v1900 = vunpack.c.h.b16 %v999
        %v1901 = vunpack.c.l.b16 %v1000
        %v1902 = vunpack.c.l.b16 %v1001
        %v1903 = vunpack.c.h.b16 %v1001
        %v1904 = vunpack.c.l.b16 %v1002
        %v1905 = vunpack.c.h.b16 %v1002
        %v1906 = vunpack.c.l.b16 %v1003
        %v1907 = vunpack.c.l.b16 %v1004
        %v1908 = vunpack.c.h.b16 %v1004
        %v1909 = vunpack.c.l.b16 %v1005
        %v1910 = vunpack.c.h.b16 %v1005
        %v1911 = vunpack.c.l.b16 %v1006
        %v1912 = vunpack.c.l.b16 %v1007
        %v1913 = vunpack.c.h.b16 %v1007
        %v1914 = vunpack.c.l.b16 %v1008
        %v1915 = vunpack.c.h.b16 %v1008
        %v1916 = vunpack.c.l.b16 %v1009
        %v1917 = vunpack.c.l.b16 %v1010
        %v1918 = vunpack.c.h.b16 %v1010
        %v1919 = vunpack.c.l.b16 %v1011
        %v1920 = vunpack.c.h.b16 %v1011
        %v1921 = vunpack.c.l.b16 %v1012
        %v1922 = vunpack.c.l.b16 %v1013
        %v1923 = vunpack.c.h.b16 %v1013
        %v1924 = vunpack.c.l.b16 %v1014
        %v1925 = vunpack.c.h.b16 %v1014
        %v1926 = vunpack.c.l.b16 %v1015
        %v1927 = vunpack.c.l.b16 %v1016
        %v1928 = vunpack.c.h.b16 %v1016
        %v1929 = vunpack.c.l.b16 %v1017
        %v1930 = vunpack.c.h.b16 %v1017
        %v1931 = vunpack.c.l.b16 %v1018
        %v1932 = vunpack.c.l.b16 %v1019
        %v1933 = vunpack.c.h.b16 %v1019
        %v1934 = vunpack.c.l.b16 %v1020
        %v1935 = vunpack.c.h.b16 %v1020
        %v1936 = vunpack.c.l.b16 %v1021
        %v1937 = vunpack.c.l.b16 %v1022
        %v1938 = vunpack.c.h.b16 %v1022
        %v1939 = vunpack.c.l.b16 %v1023
        %v1940 = vunpack.c.h.b16 %v1023
        %v1941 = vunpack.c.l.b16 %v1024
        %v1942 = vunpack.c.l.b16 %v1025
        %v1943 = vunpack.c.h.b16 %v1025
        %v1944 = vunpack.c.l.b16 %v1026
        %v1945 = vunpack.c.h.b16 %v1026
        %v1946 = vunpack.c.l.b16 %v1027
        %v1947 = vunpack.c.l.b16 %v1028
        %v1948 = vunpack.c.h.b16 %v1028
        %v1949 = vunpack.c.l.b16 %v1029
        %v1950 = vunpack.c.h.b16 %v1029
        %v1951 = vunpack.c.l.b16 %v1030
        %v1952 = vunpack.c.l.b16 %v1031
        %v1953 = vunpack.c.h.b16 %v1031
        %v1954 = vunpack.c.l.b16 %v1032
        %v1955 = vunpack.c.h.b16 %v1032
        %v1956 = vunpack.c.l.b16 %v1033
        %v1957 = vunpack.c.l.b16 %v1034
        %v1958 = vunpack.c.h.b16 %v1034
        %v1959 = vunpack.c.l.b16 %v1035
        %v1960 = vunpack.c.h.b16 %v1035
        %v1961 = vunpack.c.l.b16 %v1036
        %v1962 = vunpack.c.l.b16 %v1037
        %v1963 = vunpack.c.h.b16 %v1037
        %v1964 = vunpack.c.l.b16 %v1038
        %v1965 = vunpack.c.h.b16 %v1038
        %v1966 = vunpack.c.l.b16 %v1039
        %v1967 = vunpack.c.l.b16 %v1040
        %v1968 = vunpack.c.h.b16 %v1040
        %v1969 = vunpack.c.l.b16 %v1041
        %v1970 = vunpack.c.h.b16 %v1041
        %v1971 = vunpack.c.l.b16 %v1042
        %v1972 = vunpack.c.l.b16 %v1043
        %v1973 = vunpack.c.h.b16 %v1043
        %v1974 = vunpack.c.l.b16 %v1044
        %v1975 = vunpack.c.h.b16 %v1044
        %v1976 = vunpack.c.l.b16 %v1045
        %v1977 = vunpack.c.l.b16 %v1046
        %v1978 = vunpack.c.h.b16 %v1046
        %v1979 = vunpack.c.l.b16 %v1047
        %v1980 = vunpack.c.h.b16 %v1047
        %v1981 = vunpack.c.l.b16 %v1048
        %v1982 = vunpack.c.l.b16 %v1049
        %v1983 = vunpack.c.h.b16 %v1049
        %v1984 = vunpack.c.l.b16 %v1050
        %v1985 = vunpack.c.h.b16 %v1050
        %v1986 = vunpack.c.l.b16 %v1051
        %v1987 = vunpack.c.l.b16 %v1052
        %v1988 = vunpack.c.h.b16 %v1052
        %v1989 = vunpack.c.l.b16 %v1053
        %v1990 = vunpack.c.h.b16 %v1053
        %v1991 = vunpack.c.l.b16 %v1054
        %v1992 = vpack.c.b16 %v1517, %v1512
        %v1993 = vpack.c.b16 %v1518, %v1513
        %v1994 = vpack.c.b16 %v1519, %v1514
        %v1995 = vpack.c.b16 %v1520, %v1515
        %v1996 = vpack.c.b16 %v1521, %v1516
        %v1997 = vpack.c.b16 %v1527, %v1522
        %v1998 = vpack.c.b16 %v1528, %v1523
        %v1999 = vpack.c.b16 %v1529, %v1524
        %v2000 = vpack.c.b16 %v1530, %v1525
        %v2001 = vpack.c.b16 %v1531, %v1526
        %v2002 = vpack.c.b16 %v1537, %v1532
        %v2003 = vpack.c.b16 %v1538, %v1533
        %v2004 = vpack.c.b16 %v1539, %v1534
        %v2005 = vpack.c.b16 %v1540, %v1535
        %v2006 = vpack.c.b16 %v1541, %v1536
        %v2007 = vpack.c.b16 %v1547, %v1542
        %v2008 = vpack.c.b16 %v1548, %v1543
        %v2009 = vpack.c.b16 %v1549, %v1544
        %v2010 = vpack.c.b16 %v1550, %v1545
        %v2011 = vpack.c.b16 %v1551, %v1546
        %v2012 = vpack.c.b16 %v1557, %v1552
        %v2013 = vpack.c.b16 %v1558, %v1553
        %v2014 = vpack.c.b16 %v1559, %v1554
        %v2015 = vpack.c.b16 %v1560, %v1555
        %v2016 = vpack.c.b16 %v1561, %v1556
        %v2017 = vpack.c.b16 %v1567, %v1562
        %v2018 = vpack.c.b16 %v1568, %v1563
        %v2019 = vpack.c.b16 %v1569, %v1564
        %v2020 = vpack.c.b16 %v1570, %v1565
        %v2021 = vpack.c.b16 %v1571, %v1566
        %v2022 = vpack.c.b16 %v1577, %v1572
        %v2023 = vpack.c.b16 %v1578, %v1573
        %v2024 = vpack.c.b16 %v1579, %v1574
        %v2025 = vpack.c.b16 %v1580, %v1575
        %v2026 = vpack.c.b16 %v1581, %v1576
        %v2027 = vpack.c.b16 %v1587, %v1582
        %v2028 = vpack.c.b16 %v1588, %v1583
        %v2029 = vpack.c.b16 %v1589, %v1584
        %v2030 = vpack.c.b16 %v1590, %v1585
        %v2031 = vpack.c.b16 %v1591, %v1586
        %v2032 = vpack.c.b16 %v1597, %v1592
        %v2033 = vpack.c.b16 %v1598, %v1593
        %v2034 = vpack.c.b16 %v1599, %v1594
        %v2035 = vpack.c.b16 %v1600, %v1595
        %v2036 = vpack.c.b16 %v1601, %v1596
        %v2037 = vpack.c.b16 %v1607, %v1602
        %v2038 = vpack.c.b16 %v1608, %v1603
        %v2039 = vpack.c.b16 %v1609, %v1604
        %v2040 = vpack.c.b16 %v1610, %v1605
        %v2041 = vpack.c.b16 %v1611, %v1606
        %v2042 = vpack.c.b16 %v1617, %v1612
        %v2043 = vpack.c.b16 %v1618, %v1613
        %v2044 = vpack.c.b16 %v1619, %v1614
        %v2045 = vpack.c.b16 %v1620, %v1615
        %v2046 = vpack.c.b16 %v1621, %v1616
        %v2047 = vpack.c.b16 %v1627, %v1622
        %v2048 = vpack.c.b16 %v1628, %v1623
        %v2049 = vpack.c.b16 %v1629, %v1624
        %v2050 = vpack.c.b16 %v1630, %v1625
        %v2051 = vpack.c.b16 %v1631, %v1626
        %v2052 = vpack.c.b16 %v1637, %v1632
        %v2053 = vpack.c.b16 %v1638, %v1633
        %v2054 = vpack.c.b16 %v1639, %v1634
        %v2055 = vpack.c.b16 %v1640, %v1635
        %v2056 = vpack.c.b16 %v1641, %v1636
        %v2057 = vpack.c.b16 %v1647, %v1642
        %v2058 = vpack.c.b16 %v1648, %v1643
        %v2059 = vpack.c.b16 %v1649, %v1644
        %v2060 = vpack.c.b16 %v1650, %v1645
        %v2061 = vpack.c.b16 %v1651, %v1646
        %v2062 = vpack.c.b16 %v1657, %v1652
        %v2063 = vpack.c.b16 %v1658, %v1653
        %v2064 = vpack.c.b16 %v1659, %v1654
        %v2065 = vpack.c.b16 %v1660, %v1655
        %v2066 = vpack.c.b16 %v1661, %v1656
        %v2067 = vpack.c.b16 %v1667, %v1662
        %v2068 = vpack.c.b16 %v1668, %v1663
        %v2069 = vpack.c.b16 %v1669, %v1664
        %v2070 = vpack.c.b16 %v1670, %v1665
        %v2071 = vpack.c.b16 %v1671, %v1666
        %v2072 = vpack.c.b16 %v1677, %v1672
        %v2073 = vpack.c.b16 %v1678, %v1673
        %v2074 = vpack.c.b16 %v1679, %v1674
        %v2075 = vpack.c.b16 %v1680, %v1675
        %v2076 = vpack.c.b16 %v1681, %v1676
        %v2077 = vpack.c.b16 %v1687, %v1682
        %v2078 = vpack.c.b16 %v1688, %v1683
        %v2079 = vpack.c.b16 %v1689, %v1684
        %v2080 = vpack.c.b16 %v1690, %v1685
        %v2081 = vpack.c.b16 %v1691, %v1686
        %v2082 = vpack.c.b16 %v1697, %v1692
        %v2083 = vpack.c.b16 %v1698, %v1693
        %v2084 = vpack.c.b16 %v1699, %v1694
        %v2085 = vpack.c.b16 %v1700, %v1695
        %v2086 = vpack.c.b16 %v1701, %v1696
        %v2087 = vpack.c.b16 %v1707, %v1702
        %v2088 = vpack.c.b16 %v1708, %v1703
        %v2089 = vpack.c.b16 %v1709, %v1704
        %v2090 = vpack.c.b16 %v1710, %v1705
        %v2091 = vpack.c.b16 %v1711, %v1706
        %v2092 = vpack.c.b16 %v1717, %v1712
        %v2093 = vpack.c.b16 %v1718, %v1713
        %v2094 = vpack.c.b16 %v1719, %v1714
        %v2095 = vpack.c.b16 %v1720, %v1715
        %v2096 = vpack.c.b16 %v1721, %v1716
        %v2097 = vpack.c.b16 %v1727, %v1722
        %v2098 = vpack.c.b16 %v1728, %v1723
        %v2099 = vpack.c.b16 %v1729, %v1724
        %v2100 = vpack.c.b16 %v1730, %v1725
        %v2101 = vpack.c.b16 %v1731, %v1726
        %v2102 = vpack.c.b16 %v1737, %v1732
        %v2103 = vpack.c.b16 %v1738, %v1733
        %v2104 = vpack.c.b16 %v1739, %v1734
        %v2105 = vpack.c.b16 %v1740, %v1735
        %v2106 = vpack.c.b16 %v1741, %v1736
        %v2107 = vpack.c.b16 %v1747, %v1742
        %v2108 = vpack.c.b16 %v1748, %v1743
        %v2109 = vpack.c.b16 %v1749, %v1744
        %v2110 = vpack.c.b16 %v1750, %v1745
        %v2111 = vpack.c.b16 %v1751, %v1746
        %v2112 = vpack.c.b16 %v1757, %v1752
        %v2113 = vpack.c.b16 %v1758, %v1753
        %v2114 = vpack.c.b16 %v1759, %v1754
        %v2115 = vpack.c.b16 %v1760, %v1755
        %v2116 = vpack.c.b16 %v1761, %v1756
        %v2117 = vpack.c.b16 %v1767, %v1762
        %v2118 = vpack.c.b16 %v1768, %v1763
        %v2119 = vpack.c.b16 %v1769, %v1764
        %v2120 = vpack.c.b16 %v1770, %v1765
        %v2121 = vpack.c.b16 %v1771, %v1766
        %v2122 = vpack.c.b16 %v1777, %v1772
        %v2123 = vpack.c.b16 %v1778, %v1773
        %v2124 = vpack.c.b16 %v1779, %v1774
        %v2125 = vpack.c.b16 %v1780, %v1775
        %v2126 = vpack.c.b16 %v1781, %v1776
        %v2127 = vpack.c.b16 %v1787, %v1782
        %v2128 = vpack.c.b16 %v1788, %v1783
        %v2129 = vpack.c.b16 %v1789, %v1784
        %v2130 = vpack.c.b16 %v1790, %v1785
        %v2131 = vpack.c.b16 %v1791, %v1786
        %v2132 = vpack.c.b16 %v1797, %v1792
        %v2133 = vpack.c.b16 %v1798, %v1793
        %v2134 = vpack.c.b16 %v1799, %v1794
        %v2135 = vpack.c.b16 %v1800, %v1795
        %v2136 = vpack.c.b16 %v1801, %v1796
        %v2137 = vpack.c.b16 %v1807, %v1802
        %v2138 = vpack.c.b16 %v1808, %v1803
        %v2139 = vpack.c.b16 %v1809, %v1804
        %v2140 = vpack.c.b16 %v1810, %v1805
        %v2141 = vpack.c.b16 %v1811, %v1806
        %v2142 = vpack.c.b16 %v1817, %v1812
        %v2143 = vpack.c.b16 %v1818, %v1813
        %v2144 = vpack.c.b16 %v1819, %v1814
        %v2145 = vpack.c.b16 %v1820, %v1815
        %v2146 = vpack.c.b16 %v1821, %v1816
        %v2147 = vpack.c.b16 %v1827, %v1822
        %v2148 = vpack.c.b16 %v1828, %v1823
        %v2149 = vpack.c.b16 %v1829, %v1824
        %v2150 = vpack.c.b16 %v1830, %v1825
        %v2151 = vpack.c.b16 %v1831, %v1826
        %v2152 = vpack.c.b16 %v1837, %v1832
        %v2153 = vpack.c.b16 %v1838, %v1833
        %v2154 = vpack.c.b16 %v1839, %v1834
        %v2155 = vpack.c.b16 %v1840, %v1835
        %v2156 = vpack.c.b16 %v1841, %v1836
        %v2157 = vpack.c.b16 %v1847, %v1842
        %v2158 = vpack.c.b16 %v1848, %v1843
        %v2159 = vpack.c.b16 %v1849, %v1844
        %v2160 = vpack.c.b16 %v1850, %v1845
        %v2161 = vpack.c.b16 %v1851, %v1846
        %v2162 = vpack.c.b16 %v1857, %v1852
        %v2163 = vpack.c.b16 %v1858, %v1853
        %v2164 = vpack.c.b16 %v1859, %v1854
        %v2165 = vpack.c.b16 %v1860, %v1855
        %v2166 = vpack.c.b16 %v1861, %v1856
        %v2167 = vpack.c.b16 %v1867, %v1862
        %v2168 = vpack.c.b16 %v1868, %v1863
        %v2169 = vpack.c.b16 %v1869, %v1864
        %v2170 = vpack.c.b16 %v1870, %v1865
        %v2171 = vpack.c.b16 %v1871, %v1866
        %v2172 = vpack.c.b16 %v1877, %v1872
        %v2173 = vpack.c.b16 %v1878, %v1873
        %v2174 = vpack.c.b16 %v1879, %v1874
        %v2175 = vpack.c.b16 %v1880, %v1875
        %v2176 = vpack.c.b16 %v1881, %v1876
        %v2177 = vpack.c.b16 %v1887, %v1882
        %v2178 = vpack.c.b16 %v1888, %v1883
        %v2179 = vpack.c.b16 %v1889, %v1884
        %v2180 = vpack.c.b16 %v1890, %v1885
        %v2181 = vpack.c.b16 %v1891, %v1886
        %v2182 = vpack.c.b16 %v1897, %v1892
        %v2183 = vpack.c.b16 %v1898, %v1893
        %v2184 = vpack.c.b16 %v1899, %v1894
        %v2185 = vpack.c.b16 %v1900, %v1895
        %v2186 = vpack.c.b16 %v1901, %v1896
        %v2187 = vpack.c.b16 %v1907, %v1902
        %v2188 = vpack.c.b16 %v1908, %v1903
        %v2189 = vpack.c.b16 %v1909, %v1904
        %v2190 = vpack.c.b16 %v1910, %v1905
        %v2191 = vpack.c.b16 %v1911, %v1906
        %v2192 = vpack.c.b16 %v1917, %v1912
        %v2193 = vpack.c.b16 %v1918, %v1913
        %v2194 = vpack.c.b16 %v1919, %v1914
        %v2195 = vpack.c.b16 %v1920, %v1915
        %v2196 = vpack.c.b16 %v1921, %v1916
        %v2197 = vpack.c.b16 %v1927, %v1922
        %v2198 = vpack.c.b16 %v1928, %v1923
        %v2199 = vpack.c.b16 %v1929, %v1924
        %v2200 = vpack.c.b16 %v1930, %v1925
        %v2201 = vpack.c.b16 %v1931, %v1926
        %v2202 = vpack.c.b16 %v1937, %v1932
        %v2203 = vpack.c.b16 %v1938, %v1933
        %v2204 = vpack.c.b16 %v1939, %v1934
        %v2205 = vpack.c.b16 %v1940, %v1935
        %v2206 = vpack.c.b16 %v1941, %v1936
        %v2207 = vpack.c.b16 %v1947, %v1942
        %v2208 = vpack.c.b16 %v1948, %v1943
        %v2209 = vpack.c.b16 %v1949, %v1944
        %v2210 = vpack.c.b16 %v1950, %v1945
        %v2211 = vpack.c.b16 %v1951, %v1946
        %v2212 = vpack.c.b16 %v1957, %v1952
        %v2213 = vpack.c.b16 %v1958, %v1953
        %v2214 = vpack.c.b16 %v1959, %v1954
        %v2215 = vpack.c.b16 %v1960, %v1955
        %v2216 = vpack.c.b16 %v1961, %v1956
        %v2217 = vpack.c.b16 %v1967, %v1962
        %v2218 = vpack.c.b16 %v1968, %v1963
        %v2219 = vpack.c.b16 %v1969, %v1964
        %v2220 = vpack.c.b16 %v1970, %v1965
        %v2221 = vpack.c.b16 %v1971, %v1966
        %v2222 = vpack.c.b16 %v1977, %v1972
        %v2223 = vpack.c.b16 %v1978, %v1973
        %v2224 = vpack.c.b16 %v1979, %v1974
        %v2225 = vpack.c.b16 %v1980, %v1975
        %v2226 = vpack.c.b16 %v1981, %v1976
        %v2227 = vpack.c.b16 %v1987, %v1982
        %v2228 = vpack.c.b16 %v1988, %v1983
        %v2229 = vpack.c.b16 %v1989, %v1984
        %v2230 = vpack.c.b16 %v1990, %v1985
        %v2231 = vpack.c.b16 %v1991, %v1986
        %2472 = vmatpush.bf16.msra.mxu0 %v2027
        %2473 = vmatpush.bf16.msra.mxu0 %v2022
        %2474 = vmatpush.bf16.msra.mxu0 %v2017
        %2475 = vmatpush.bf16.msra.mxu0 %v2012
        %2476 = vmatpush.bf16.msra.mxu0 %v2007
        %2477 = vmatpush.bf16.msra.mxu0 %v2002
        %2478 = vmatpush.bf16.msra.mxu0 %v1997
        %2479 = vmatpush.bf16.msra.mxu0 %v1992
        %2480 = vmatmul.bf16.gmra.mxu0 %v1212
        %v2481 = vpop.f32.mrf.mxu0
        %v2482 = vadd.f32 %v1057, %v2481
        %v2483 = vpop.f32.mrf.mxu0
        %2484 = vdwg.mxu0
        %2485 = vmatpush.bf16.msra.mxu0 %v2067
        %2486 = vmatpush.bf16.msra.mxu0 %v2062
        %2487 = vmatpush.bf16.msra.mxu0 %v2057
        %2488 = vmatpush.bf16.msra.mxu0 %v2052
        %2489 = vmatpush.bf16.msra.mxu0 %v2047
        %2490 = vmatpush.bf16.msra.mxu0 %v2042
        %2491 = vmatpush.bf16.msra.mxu0 %v2037
        %2492 = vmatpush.bf16.msra.mxu0 %v2032
        %2493 = vmatmul.bf16.gmra.mxu0 %v1213
        %v2494 = vpop.f32.mrf.mxu0
        %v2495 = vadd.f32 %v2482, %v2494
        %v2496 = vpop.f32.mrf.mxu0
        %2497 = vdwg.mxu0
        %2498 = vmatpush.bf16.msra.mxu0 %v2107
        %2499 = vmatpush.bf16.msra.mxu0 %v2102
        %2500 = vmatpush.bf16.msra.mxu0 %v2097
        %2501 = vmatpush.bf16.msra.mxu0 %v2092
        %2502 = vmatpush.bf16.msra.mxu0 %v2087
        %2503 = vmatpush.bf16.msra.mxu0 %v2082
        %2504 = vmatpush.bf16.msra.mxu0 %v2077
        %2505 = vmatpush.bf16.msra.mxu0 %v2072
        %2506 = vmatmul.bf16.gmra.mxu0 %v1214
        %v2507 = vpop.f32.mrf.mxu0
        %v2508 = vadd.f32 %v2495, %v2507
        %v2509 = vpop.f32.mrf.mxu0
        %2510 = vdwg.mxu0
        %2511 = vmatpush.bf16.msra.mxu0 %v2147
        %2512 = vmatpush.bf16.msra.mxu0 %v2142
        %2513 = vmatpush.bf16.msra.mxu0 %v2137
        %2514 = vmatpush.bf16.msra.mxu0 %v2132
        %2515 = vmatpush.bf16.msra.mxu0 %v2127
        %2516 = vmatpush.bf16.msra.mxu0 %v2122
        %2517 = vmatpush.bf16.msra.mxu0 %v2117
        %2518 = vmatpush.bf16.msra.mxu0 %v2112
        %2519 = vmatmul.bf16.gmra.mxu0 %v1215
        %v2520 = vpop.f32.mrf.mxu0
        %v2521 = vadd.f32 %v2508, %v2520
        %v2522 = vpop.f32.mrf.mxu0
        %2523 = vdwg.mxu0
        %2524 = vmatpush.bf16.msra.mxu0 %v2187
        %2525 = vmatpush.bf16.msra.mxu0 %v2182
        %2526 = vmatpush.bf16.msra.mxu0 %v2177
        %2527 = vmatpush.bf16.msra.mxu0 %v2172
        %2528 = vmatpush.bf16.msra.mxu0 %v2167
        %2529 = vmatpush.bf16.msra.mxu0 %v2162
        %2530 = vmatpush.bf16.msra.mxu0 %v2157
        %2531 = vmatpush.bf16.msra.mxu0 %v2152
        %2532 = vmatmul.bf16.gmra.mxu0 %v1216
        %v2533 = vpop.f32.mrf.mxu0
        %v2534 = vadd.f32 %v2521, %v2533
        %v2535 = vpop.f32.mrf.mxu0
        %2536 = vdwg.mxu0
        %2537 = vmatpush.bf16.msra.mxu0 %v2227
        %2538 = vmatpush.bf16.msra.mxu0 %v2222
        %2539 = vmatpush.bf16.msra.mxu0 %v2217
        %2540 = vmatpush.bf16.msra.mxu0 %v2212
        %2541 = vmatpush.bf16.msra.mxu0 %v2207
        %2542 = vmatpush.bf16.msra.mxu0 %v2202
        %2543 = vmatpush.bf16.msra.mxu0 %v2197
        %2544 = vmatpush.bf16.msra.mxu0 %v2192
        %2545 = vmatmul.bf16.gmra.mxu0 %v1217
        %v2546 = vpop.f32.mrf.mxu0
        %v2547 = vadd.f32 %v2534, %v2546
        %v2548 = vpop.f32.mrf.mxu0
        %2549 = vdwg.mxu0
        %2550 = vmatpush.bf16.msra.mxu0 %v2028
        %2551 = vmatpush.bf16.msra.mxu0 %v2023
        %2552 = vmatpush.bf16.msra.mxu0 %v2018
        %2553 = vmatpush.bf16.msra.mxu0 %v2013
        %2554 = vmatpush.bf16.msra.mxu0 %v2008
        %2555 = vmatpush.bf16.msra.mxu0 %v2003
        %2556 = vmatpush.bf16.msra.mxu0 %v1998
        %2557 = vmatpush.bf16.msra.mxu0 %v1993
        %2558 = vmatmul.bf16.gmra.mxu0 %v1212
        %v2559 = vpop.f32.mrf.mxu0
        %v2560 = vadd.f32 %v1058, %v2559
        %v2561 = vpop.f32.mrf.mxu0
        %2562 = vdwg.mxu0
        %2563 = vmatpush.bf16.msra.mxu0 %v2068
        %2564 = vmatpush.bf16.msra.mxu0 %v2063
        %2565 = vmatpush.bf16.msra.mxu0 %v2058
        %2566 = vmatpush.bf16.msra.mxu0 %v2053
        %2567 = vmatpush.bf16.msra.mxu0 %v2048
        %2568 = vmatpush.bf16.msra.mxu0 %v2043
        %2569 = vmatpush.bf16.msra.mxu0 %v2038
        %2570 = vmatpush.bf16.msra.mxu0 %v2033
        %2571 = vmatmul.bf16.gmra.mxu0 %v1213
        %v2572 = vpop.f32.mrf.mxu0
        %v2573 = vadd.f32 %v2560, %v2572
        %v2574 = vpop.f32.mrf.mxu0
        %2575 = vdwg.mxu0
        %2576 = vmatpush.bf16.msra.mxu0 %v2108
        %2577 = vmatpush.bf16.msra.mxu0 %v2103
        %2578 = vmatpush.bf16.msra.mxu0 %v2098
        %2579 = vmatpush.bf16.msra.mxu0 %v2093
        %2580 = vmatpush.bf16.msra.mxu0 %v2088
        %2581 = vmatpush.bf16.msra.mxu0 %v2083
        %2582 = vmatpush.bf16.msra.mxu0 %v2078
        %2583 = vmatpush.bf16.msra.mxu0 %v2073
        %2584 = vmatmul.bf16.gmra.mxu0 %v1214
        %v2585 = vpop.f32.mrf.mxu0
        %v2586 = vadd.f32 %v2573, %v2585
        %v2587 = vpop.f32.mrf.mxu0
        %2588 = vdwg.mxu0
        %2589 = vmatpush.bf16.msra.mxu0 %v2148
        %2590 = vmatpush.bf16.msra.mxu0 %v2143
        %2591 = vmatpush.bf16.msra.mxu0 %v2138
        %2592 = vmatpush.bf16.msra.mxu0 %v2133
        %2593 = vmatpush.bf16.msra.mxu0 %v2128
        %2594 = vmatpush.bf16.msra.mxu0 %v2123
        %2595 = vmatpush.bf16.msra.mxu0 %v2118
        %2596 = vmatpush.bf16.msra.mxu0 %v2113
        %2597 = vmatmul.bf16.gmra.mxu0 %v1215
        %v2598 = vpop.f32.mrf.mxu0
        %v2599 = vadd.f32 %v2586, %v2598
        %v2600 = vpop.f32.mrf.mxu0
        %2601 = vdwg.mxu0
        %2602 = vmatpush.bf16.msra.mxu0 %v2188
        %2603 = vmatpush.bf16.msra.mxu0 %v2183
        %2604 = vmatpush.bf16.msra.mxu0 %v2178
        %2605 = vmatpush.bf16.msra.mxu0 %v2173
        %2606 = vmatpush.bf16.msra.mxu0 %v2168
        %2607 = vmatpush.bf16.msra.mxu0 %v2163
        %2608 = vmatpush.bf16.msra.mxu0 %v2158
        %2609 = vmatpush.bf16.msra.mxu0 %v2153
        %2610 = vmatmul.bf16.gmra.mxu0 %v1216
        %v2611 = vpop.f32.mrf.mxu0
        %v2612 = vadd.f32 %v2599, %v2611
        %v2613 = vpop.f32.mrf.mxu0
        %2614 = vdwg.mxu0
        %2615 = vmatpush.bf16.msra.mxu0 %v2228
        %2616 = vmatpush.bf16.msra.mxu0 %v2223
        %2617 = vmatpush.bf16.msra.mxu0 %v2218
        %2618 = vmatpush.bf16.msra.mxu0 %v2213
        %2619 = vmatpush.bf16.msra.mxu0 %v2208
        %2620 = vmatpush.bf16.msra.mxu0 %v2203
        %2621 = vmatpush.bf16.msra.mxu0 %v2198
        %2622 = vmatpush.bf16.msra.mxu0 %v2193
        %2623 = vmatmul.bf16.gmra.mxu0 %v1217
        %v2624 = vpop.f32.mrf.mxu0
        %v2625 = vadd.f32 %v2612, %v2624
        %v2626 = vpop.f32.mrf.mxu0
        %2627 = vdwg.mxu0
        %2628 = vmatpush.bf16.msra.mxu0 %v2029
        %2629 = vmatpush.bf16.msra.mxu0 %v2024
        %2630 = vmatpush.bf16.msra.mxu0 %v2019
        %2631 = vmatpush.bf16.msra.mxu0 %v2014
        %2632 = vmatpush.bf16.msra.mxu0 %v2009
        %2633 = vmatpush.bf16.msra.mxu0 %v2004
        %2634 = vmatpush.bf16.msra.mxu0 %v1999
        %2635 = vmatpush.bf16.msra.mxu0 %v1994
        %2636 = vmatmul.bf16.gmra.mxu0 %v1212
        %v2637 = vpop.f32.mrf.mxu0
        %v2638 = vadd.f32 %v1059, %v2637
        %v2639 = vpop.f32.mrf.mxu0
        %2640 = vdwg.mxu0
        %2641 = vmatpush.bf16.msra.mxu0 %v2069
        %2642 = vmatpush.bf16.msra.mxu0 %v2064
        %2643 = vmatpush.bf16.msra.mxu0 %v2059
        %2644 = vmatpush.bf16.msra.mxu0 %v2054
        %2645 = vmatpush.bf16.msra.mxu0 %v2049
        %2646 = vmatpush.bf16.msra.mxu0 %v2044
        %2647 = vmatpush.bf16.msra.mxu0 %v2039
        %2648 = vmatpush.bf16.msra.mxu0 %v2034
        %2649 = vmatmul.bf16.gmra.mxu0 %v1213
        %v2650 = vpop.f32.mrf.mxu0
        %v2651 = vadd.f32 %v2638, %v2650
        %v2652 = vpop.f32.mrf.mxu0
        %2653 = vdwg.mxu0
        %2654 = vmatpush.bf16.msra.mxu0 %v2109
        %2655 = vmatpush.bf16.msra.mxu0 %v2104
        %2656 = vmatpush.bf16.msra.mxu0 %v2099
        %2657 = vmatpush.bf16.msra.mxu0 %v2094
        %2658 = vmatpush.bf16.msra.mxu0 %v2089
        %2659 = vmatpush.bf16.msra.mxu0 %v2084
        %2660 = vmatpush.bf16.msra.mxu0 %v2079
        %2661 = vmatpush.bf16.msra.mxu0 %v2074
        %2662 = vmatmul.bf16.gmra.mxu0 %v1214
        %v2663 = vpop.f32.mrf.mxu0
        %v2664 = vadd.f32 %v2651, %v2663
        %v2665 = vpop.f32.mrf.mxu0
        %2666 = vdwg.mxu0
        %2667 = vmatpush.bf16.msra.mxu0 %v2149
        %2668 = vmatpush.bf16.msra.mxu0 %v2144
        %2669 = vmatpush.bf16.msra.mxu0 %v2139
        %2670 = vmatpush.bf16.msra.mxu0 %v2134
        %2671 = vmatpush.bf16.msra.mxu0 %v2129
        %2672 = vmatpush.bf16.msra.mxu0 %v2124
        %2673 = vmatpush.bf16.msra.mxu0 %v2119
        %2674 = vmatpush.bf16.msra.mxu0 %v2114
        %2675 = vmatmul.bf16.gmra.mxu0 %v1215
        %v2676 = vpop.f32.mrf.mxu0
        %v2677 = vadd.f32 %v2664, %v2676
        %v2678 = vpop.f32.mrf.mxu0
        %2679 = vdwg.mxu0
        %2680 = vmatpush.bf16.msra.mxu0 %v2189
        %2681 = vmatpush.bf16.msra.mxu0 %v2184
        %2682 = vmatpush.bf16.msra.mxu0 %v2179
        %2683 = vmatpush.bf16.msra.mxu0 %v2174
        %2684 = vmatpush.bf16.msra.mxu0 %v2169
        %2685 = vmatpush.bf16.msra.mxu0 %v2164
        %2686 = vmatpush.bf16.msra.mxu0 %v2159
        %2687 = vmatpush.bf16.msra.mxu0 %v2154
        %2688 = vmatmul.bf16.gmra.mxu0 %v1216
        %v2689 = vpop.f32.mrf.mxu0
        %v2690 = vadd.f32 %v2677, %v2689
        %v2691 = vpop.f32.mrf.mxu0
        %2692 = vdwg.mxu0
        %2693 = vmatpush.bf16.msra.mxu0 %v2229
        %2694 = vmatpush.bf16.msra.mxu0 %v2224
        %2695 = vmatpush.bf16.msra.mxu0 %v2219
        %2696 = vmatpush.bf16.msra.mxu0 %v2214
        %2697 = vmatpush.bf16.msra.mxu0 %v2209
        %2698 = vmatpush.bf16.msra.mxu0 %v2204
        %2699 = vmatpush.bf16.msra.mxu0 %v2199
        %2700 = vmatpush.bf16.msra.mxu0 %v2194
        %2701 = vmatmul.bf16.gmra.mxu0 %v1217
        %v2702 = vpop.f32.mrf.mxu0
        %v2703 = vadd.f32 %v2690, %v2702
        %v2704 = vpop.f32.mrf.mxu0
        %2705 = vdwg.mxu0
        %2706 = vmatpush.bf16.msra.mxu0 %v2030
        %2707 = vmatpush.bf16.msra.mxu0 %v2025
        %2708 = vmatpush.bf16.msra.mxu0 %v2020
        %2709 = vmatpush.bf16.msra.mxu0 %v2015
        %2710 = vmatpush.bf16.msra.mxu0 %v2010
        %2711 = vmatpush.bf16.msra.mxu0 %v2005
        %2712 = vmatpush.bf16.msra.mxu0 %v2000
        %2713 = vmatpush.bf16.msra.mxu0 %v1995
        %2714 = vmatmul.bf16.gmra.mxu0 %v1212
        %v2715 = vpop.f32.mrf.mxu0
        %v2716 = vadd.f32 %v1060, %v2715
        %v2717 = vpop.f32.mrf.mxu0
        %2718 = vdwg.mxu0
        %2719 = vmatpush.bf16.msra.mxu0 %v2070
        %2720 = vmatpush.bf16.msra.mxu0 %v2065
        %2721 = vmatpush.bf16.msra.mxu0 %v2060
        %2722 = vmatpush.bf16.msra.mxu0 %v2055
        %2723 = vmatpush.bf16.msra.mxu0 %v2050
        %2724 = vmatpush.bf16.msra.mxu0 %v2045
        %2725 = vmatpush.bf16.msra.mxu0 %v2040
        %2726 = vmatpush.bf16.msra.mxu0 %v2035
        %2727 = vmatmul.bf16.gmra.mxu0 %v1213
        %v2728 = vpop.f32.mrf.mxu0
        %v2729 = vadd.f32 %v2716, %v2728
        %v2730 = vpop.f32.mrf.mxu0
        %2731 = vdwg.mxu0
        %2732 = vmatpush.bf16.msra.mxu0 %v2110
        %2733 = vmatpush.bf16.msra.mxu0 %v2105
        %2734 = vmatpush.bf16.msra.mxu0 %v2100
        %2735 = vmatpush.bf16.msra.mxu0 %v2095
        %2736 = vmatpush.bf16.msra.mxu0 %v2090
        %2737 = vmatpush.bf16.msra.mxu0 %v2085
        %2738 = vmatpush.bf16.msra.mxu0 %v2080
        %2739 = vmatpush.bf16.msra.mxu0 %v2075
        %2740 = vmatmul.bf16.gmra.mxu0 %v1214
        %v2741 = vpop.f32.mrf.mxu0
        %v2742 = vadd.f32 %v2729, %v2741
        %v2743 = vpop.f32.mrf.mxu0
        %2744 = vdwg.mxu0
        %2745 = vmatpush.bf16.msra.mxu0 %v2150
        %2746 = vmatpush.bf16.msra.mxu0 %v2145
        %2747 = vmatpush.bf16.msra.mxu0 %v2140
        %2748 = vmatpush.bf16.msra.mxu0 %v2135
        %2749 = vmatpush.bf16.msra.mxu0 %v2130
        %2750 = vmatpush.bf16.msra.mxu0 %v2125
        %2751 = vmatpush.bf16.msra.mxu0 %v2120
        %2752 = vmatpush.bf16.msra.mxu0 %v2115
        %2753 = vmatmul.bf16.gmra.mxu0 %v1215
        %v2754 = vpop.f32.mrf.mxu0
        %v2755 = vadd.f32 %v2742, %v2754
        %v2756 = vpop.f32.mrf.mxu0
        %2757 = vdwg.mxu0
        %2758 = vmatpush.bf16.msra.mxu0 %v2190
        %2759 = vmatpush.bf16.msra.mxu0 %v2185
        %2760 = vmatpush.bf16.msra.mxu0 %v2180
        %2761 = vmatpush.bf16.msra.mxu0 %v2175
        %2762 = vmatpush.bf16.msra.mxu0 %v2170
        %2763 = vmatpush.bf16.msra.mxu0 %v2165
        %2764 = vmatpush.bf16.msra.mxu0 %v2160
        %2765 = vmatpush.bf16.msra.mxu0 %v2155
        %2766 = vmatmul.bf16.gmra.mxu0 %v1216
        %v2767 = vpop.f32.mrf.mxu0
        %v2768 = vadd.f32 %v2755, %v2767
        %v2769 = vpop.f32.mrf.mxu0
        %2770 = vdwg.mxu0
        %2771 = vmatpush.bf16.msra.mxu0 %v2230
        %2772 = vmatpush.bf16.msra.mxu0 %v2225
        %2773 = vmatpush.bf16.msra.mxu0 %v2220
        %2774 = vmatpush.bf16.msra.mxu0 %v2215
        %2775 = vmatpush.bf16.msra.mxu0 %v2210
        %2776 = vmatpush.bf16.msra.mxu0 %v2205
        %2777 = vmatpush.bf16.msra.mxu0 %v2200
        %2778 = vmatpush.bf16.msra.mxu0 %v2195
        %2779 = vmatmul.bf16.gmra.mxu0 %v1217
        %v2780 = vpop.f32.mrf.mxu0
        %v2781 = vadd.f32 %v2768, %v2780
        %v2782 = vpop.f32.mrf.mxu0
        %2783 = vdwg.mxu0
        %2784 = vmatpush.bf16.msra.mxu0 %v2031
        %2785 = vmatpush.bf16.msra.mxu0 %v2026
        %2786 = vmatpush.bf16.msra.mxu0 %v2021
        %2787 = vmatpush.bf16.msra.mxu0 %v2016
        %2788 = vmatpush.bf16.msra.mxu0 %v2011
        %2789 = vmatpush.bf16.msra.mxu0 %v2006
        %2790 = vmatpush.bf16.msra.mxu0 %v2001
        %2791 = vmatpush.bf16.msra.mxu0 %v1996
        %2792 = vmatmul.bf16.gmra.mxu0 %v1212
        %v2793 = vpop.f32.mrf.mxu0
        %v2794 = vadd.f32 %v1061, %v2793
        %v2795 = vpop.f32.mrf.mxu0
        %2796 = vdwg.mxu0
        %2797 = vmatpush.bf16.msra.mxu0 %v2071
        %2798 = vmatpush.bf16.msra.mxu0 %v2066
        %2799 = vmatpush.bf16.msra.mxu0 %v2061
        %2800 = vmatpush.bf16.msra.mxu0 %v2056
        %2801 = vmatpush.bf16.msra.mxu0 %v2051
        %2802 = vmatpush.bf16.msra.mxu0 %v2046
        %2803 = vmatpush.bf16.msra.mxu0 %v2041
        %2804 = vmatpush.bf16.msra.mxu0 %v2036
        %2805 = vmatmul.bf16.gmra.mxu0 %v1213
        %v2806 = vpop.f32.mrf.mxu0
        %v2807 = vadd.f32 %v2794, %v2806
        %v2808 = vpop.f32.mrf.mxu0
        %2809 = vdwg.mxu0
        %2810 = vmatpush.bf16.msra.mxu0 %v2111
        %2811 = vmatpush.bf16.msra.mxu0 %v2106
        %2812 = vmatpush.bf16.msra.mxu0 %v2101
        %2813 = vmatpush.bf16.msra.mxu0 %v2096
        %2814 = vmatpush.bf16.msra.mxu0 %v2091
        %2815 = vmatpush.bf16.msra.mxu0 %v2086
        %2816 = vmatpush.bf16.msra.mxu0 %v2081
        %2817 = vmatpush.bf16.msra.mxu0 %v2076
        %2818 = vmatmul.bf16.gmra.mxu0 %v1214
        %v2819 = vpop.f32.mrf.mxu0
        %v2820 = vadd.f32 %v2807, %v2819
        %v2821 = vpop.f32.mrf.mxu0
        %2822 = vdwg.mxu0
        %2823 = vmatpush.bf16.msra.mxu0 %v2151
        %2824 = vmatpush.bf16.msra.mxu0 %v2146
        %2825 = vmatpush.bf16.msra.mxu0 %v2141
        %2826 = vmatpush.bf16.msra.mxu0 %v2136
        %2827 = vmatpush.bf16.msra.mxu0 %v2131
        %2828 = vmatpush.bf16.msra.mxu0 %v2126
        %2829 = vmatpush.bf16.msra.mxu0 %v2121
        %2830 = vmatpush.bf16.msra.mxu0 %v2116
        %2831 = vmatmul.bf16.gmra.mxu0 %v1215
        %v2832 = vpop.f32.mrf.mxu0
        %v2833 = vadd.f32 %v2820, %v2832
        %v2834 = vpop.f32.mrf.mxu0
        %2835 = vdwg.mxu0
        %2836 = vmatpush.bf16.msra.mxu0 %v2191
        %2837 = vmatpush.bf16.msra.mxu0 %v2186
        %2838 = vmatpush.bf16.msra.mxu0 %v2181
        %2839 = vmatpush.bf16.msra.mxu0 %v2176
        %2840 = vmatpush.bf16.msra.mxu0 %v2171
        %2841 = vmatpush.bf16.msra.mxu0 %v2166
        %2842 = vmatpush.bf16.msra.mxu0 %v2161
        %2843 = vmatpush.bf16.msra.mxu0 %v2156
        %2844 = vmatmul.bf16.gmra.mxu0 %v1216
        %v2845 = vpop.f32.mrf.mxu0
        %v2846 = vadd.f32 %v2833, %v2845
        %v2847 = vpop.f32.mrf.mxu0
        %2848 = vdwg.mxu0
        %2849 = vmatpush.bf16.msra.mxu0 %v2231
        %2850 = vmatpush.bf16.msra.mxu0 %v2226
        %2851 = vmatpush.bf16.msra.mxu0 %v2221
        %2852 = vmatpush.bf16.msra.mxu0 %v2216
        %2853 = vmatpush.bf16.msra.mxu0 %v2211
        %2854 = vmatpush.bf16.msra.mxu0 %v2206
        %2855 = vmatpush.bf16.msra.mxu0 %v2201
        %2856 = vmatpush.bf16.msra.mxu0 %v2196
        %2857 = vmatmul.bf16.gmra.mxu0 %v1217
        %v2858 = vpop.f32.mrf.mxu0
        %v2859 = vadd.f32 %v2846, %v2858
        %v2860 = vpop.f32.mrf.mxu0
        %2861 = vdwg.mxu0
        %2862 = vst [vmem:[%s248] sm:$0xff] %v2547
        %2863 = vst [vmem:[%s248 + $0x8] sm:$0xff] %v2625
        %2864 = vst [vmem:[%s248 + $0x10] sm:$0xff] %v2703
        %2865 = vst [vmem:[%s248 + $0x18] sm:$0xff] %v2781
        %2866 = vst [vmem:[%s248 + $0x20] sm:$0xff] %v2859
        %s2867 = sand.u32 %s124, 1
        %s2868 = scalar_lea.sflag [#allocation4], %s2867
        %s2869 = sand.u32 %s124, 1
        %s2870 = smul.addr %s2869, 40
        %s2871 = scalar_lea.vmem [#allocation7], %s2870
        // Predicated region
        $region45: #{tpu_custom_call.1} parent=35 // pred_check
          %p2872 = pneg %p134
        $region46: #{tpu_custom_call.1} parent=35 // pred_check_branch
          %2874 = sbr.rel (%p2872) target = $region48
        $region47: #{tpu_custom_call.1} parent=35 // pred_region
          %2876 = vsyncadd %s2868, 0
          %s2877 = smul.addr %s22, 5
          %s2878 = smul.addr %s2877, 8
          %s2879 = scalar_lea.hbm %s4, %s2878
          %s2881 = sshll.u32 %s2871, 4
          %s2882 = int_to_ptr.vmem [resolvable:$true] %s2881
          %s2883 = sshll.u32 %s2879, 4
          %s2884 = int_to_ptr.hbm [resolvable:$true] %s2883
          %2886 = dma.vmem_to_hbm [thread:$0]  %s2882, 640, %s2884, %s2868
        $region48: #{tpu_custom_call.1} parent=35 // pred_fallthru
          _
      $region36: #{tpu_custom_call.1} parent=5 // pred_fallthru
        _
      %p2887 = scmp.le.s32.totalorder 2, %s17
      // Predicated region
      $region49: #{tpu_custom_call.1} parent=5 // pred_check
        %p2888 = pneg %p2887
      $region50: #{tpu_custom_call.1} parent=5 // pred_check_branch
        %2890 = sbr.rel (%p2888) target = $region52
      $region51: #{tpu_custom_call.1} parent=5 // pred_region
        %s2891 = ssub.s32 %s17, 2
        // Predicated region
        $region53: #{tpu_custom_call.1} parent=51 // pred_check
          %p2892 = pneg %p140
        $region54: #{tpu_custom_call.1} parent=51 // pred_check_branch
          %2894 = sbr.rel (%p2892) target = $region56
        $region55: #{tpu_custom_call.1} parent=51 // pred_region
          %s2895 = sand.u32 %s125, 1
          %s2896 = scalar_lea.sflag [#allocation4], %s2895
          %s2897 = sand.u32 %s125, 1
          %s2898 = smul.addr %s2897, 40
          %s2899 = scalar_lea.vmem [#allocation7], %s2898
          %2901 = dma.done %s2896, 640
        $region56: #{tpu_custom_call.1} parent=51 // pred_fallthru
          _
      $region52: #{tpu_custom_call.1} parent=5 // pred_fallthru
        _
    $region6: #{tpu_custom_call.1} parent=1 // loop_footer
      %s21 = sadd.s32 1, %s17
    $region7: #{tpu_custom_call.1} parent=1 // loop_footer_branch
      %16 = sbr.rel target = $region3
    $region8: #{tpu_custom_call.1} parent=1 // loop_exit
      _
    %2902 = vsyncpa [#allocation3], 1
    %s2903 = scalar_lea.sflag [#allocation3], 1
    %2904 = vsyncpa %s2903, 1
    %2905 = vsyncpa [#allocation6], 1
    %2906 = vsyncpa [#allocation4], 1
    %s2907 = scalar_lea.sflag [#allocation4], 1
    %2908 = vsyncpa %s2907, 1

</llo_original>
